<compile_context>
chip_gen: v5e
topology: v5e:2x2
jax: 0.10.0
libtpu: 0.0.40
codegen_flags: <defaults>
</compile_context>

<pallas_src>
import jax
import jax.numpy as jnp
from jax.experimental import pallas as pl
from jax.experimental.pallas import tpu as pltpu  # noqa: F401  (kept for completeness)

# ----- "config" (small, deterministic) --------------------------------------
B = 2            # batch
SEQ = 8          # prooftrace_sequence_length
HIDDEN = 32      # prooftrace_hidden_size
LSTM_H = 32      # prooftrace_lstm_hidden_size
HEAD_H = 32      # prooftrace_head_hidden_size
LAYERS = 2       # prooftrace_transformer_layer_count (reused as lstm layer count)


def torso_lstm_kernel(act_ref, arg_ref,
                      w_in_ref, b_in_ref,
                      w_ih_ref, w_hh_ref, b_g_ref,
                      w_out_ref, b_out_ref,
                      out_ref):
    H = LSTM_H

    # adapter_in: Linear(HIDDEN -> H) on all SEQ*B time-major rows at once.
    x = act_ref[...] + arg_ref[...]                                # (SEQ*B, HIDDEN)
    seq = (jnp.dot(x, w_in_ref[...], preferred_element_type=jnp.float32)
           + b_in_ref[...])                                        # (SEQ*B, H)

    # Stacked LSTM, PyTorch gate order (i, f, g, o), zero initial (h, c).
    for layer in range(LAYERS):                        # static unroll over layers
        # Hoisted input->hidden projection for ALL timesteps: one matmul per
        # layer, off the serial recurrence chain.
        gp = (jnp.dot(seq, w_ih_ref[layer], preferred_element_type=jnp.float32)
              + b_g_ref[layer])                                    # (SEQ*B, 4H)
        w_hh = w_hh_ref[layer]                                     # (H, 4H), loaded once

        h = jnp.zeros((B, H), jnp.float32)
        c = jnp.zeros((B, H), jnp.float32)
        outs = []
        for t in range(SEQ):                           # static unroll over time
            # Contiguous (B, 4H) slice of the precomputed gate inputs.
            gates = gp[t * B:(t + 1) * B, :] + jnp.dot(
                h, w_hh, preferred_element_type=jnp.float32)       # (B, 4H)
            sg = jax.nn.sigmoid(gates)                 # one full-width EUP pass
            tg = jnp.tanh(gates[:, 2 * H:3 * H])       # tanh only on the g block
            c = sg[:, H:2 * H] * c + sg[:, 0:H] * tg
            h = sg[:, 3 * H:4 * H] * jnp.tanh(c)
            outs.append(h)                             # SSA value; no per-step store
        # Stack once per layer; stores stay off the recurrence critical path.
        seq = jnp.concatenate(outs, axis=0)            # (SEQ*B, H), time-major

    # adapter_out: Linear(H -> HEAD_H) on all rows at once.
    out_ref[...] = (jnp.dot(seq, w_out_ref[...],
                            preferred_element_type=jnp.float32)
                    + b_out_ref[...])                              # (SEQ*B, HEAD_H)


@jax.jit
def torso_forward(action_embeds, argument_embeds, params):
    """action_embeds, argument_embeds: (B, S, HIDDEN).  Returns (B, S, HEAD_H)."""
    w_in, b_in, w_ih, w_hh, b_g, w_out, b_out = params

    # Wrapper-side layout plumbing: time-major flat layout (row = t*B + b).
    act_tm = jnp.transpose(action_embeds, (1, 0, 2)).reshape(SEQ * B, HIDDEN)
    arg_tm = jnp.transpose(argument_embeds, (1, 0, 2)).reshape(SEQ * B, HIDDEN)

    inputs = (act_tm, arg_tm, w_in, b_in, w_ih, w_hh, b_g, w_out, b_out)

    # Advisory cost estimate (logical FLOPs / transcendentals / bytes).
    flops = (2 * B * SEQ * HIDDEN * LSTM_H
             + LAYERS * 2 * (2 * B * SEQ * LSTM_H * 4 * LSTM_H)
             + 2 * B * SEQ * LSTM_H * HEAD_H)
    transcendentals = LAYERS * SEQ * B * (4 * LSTM_H + 2 * LSTM_H)
    bytes_accessed = 4 * (sum(int(a.size) for a in inputs) + B * SEQ * HEAD_H)

    out_tm = pl.pallas_call(
        torso_lstm_kernel,
        out_shape=jax.ShapeDtypeStruct((SEQ * B, HEAD_H), jnp.float32),
        cost_estimate=pl.CostEstimate(flops=flops,
                                      transcendentals=transcendentals,
                                      bytes_accessed=bytes_accessed),
    )(*inputs)

    # Back to the PyTorch batch-major (B, SEQ, HEAD_H) layout.
    return jnp.transpose(out_tm.reshape(SEQ, B, HEAD_H), (1, 0, 2))


# ----- deterministic parameter init (matches module shapes) ------------------
def make_params(key):
    ks = jax.random.split(key, 7)
    scale = 0.1
    w_in = scale * jax.random.normal(ks[0], (HIDDEN, LSTM_H), jnp.float32)
    b_in = scale * jax.random.normal(ks[1], (1, LSTM_H), jnp.float32)
    # per-layer LSTM weights; PyTorch stores (4H, in) / (4H, H) — we keep the
    # transposed (in, 4H) layout for right-multiplication, gate order i,f,g,o.
    w_ih = scale * jax.random.normal(ks[2], (LAYERS, LSTM_H, 4 * LSTM_H), jnp.float32)
    w_hh = scale * jax.random.normal(ks[3], (LAYERS, LSTM_H, 4 * LSTM_H), jnp.float32)
    b_g = scale * jax.random.normal(ks[4], (LAYERS, 1, 4 * LSTM_H), jnp.float32)  # b_ih + b_hh
    w_out = scale * jax.random.normal(ks[5], (LSTM_H, HEAD_H), jnp.float32)
    b_out = scale * jax.random.normal(ks[6], (1, HEAD_H), jnp.float32)
    return (w_in, b_in, w_ih, w_hh, b_g, w_out, b_out)


# ----- pure-JAX reference (mirrors PyTorch semantics) -------------------------
def reference(act, arg, params):
    w_in, b_in, w_ih, w_hh, b_g, w_out, b_out = params
    H = LSTM_H
    seq = (act + arg) @ w_in + b_in[0]                    # (B, S, H)
    for layer in range(LAYERS):
        h = jnp.zeros((B, H), jnp.float32)
        c = jnp.zeros((B, H), jnp.float32)
        outs = []
        for t in range(SEQ):
            g = seq[:, t, :] @ w_ih[layer] + h @ w_hh[layer] + b_g[layer, 0]
            i_g = jax.nn.sigmoid(g[:, :H])
            f_g = jax.nn.sigmoid(g[:, H:2 * H])
            g_g = jnp.tanh(g[:, 2 * H:3 * H])
            o_g = jax.nn.sigmoid(g[:, 3 * H:])
            c = f_g * c + i_g * g_g
            h = o_g * jnp.tanh(c)
            outs.append(h)
        seq = jnp.stack(outs, axis=1)
    return seq @ w_out + b_out[0]


if __name__ == "__main__":
    key = jax.random.PRNGKey(0)
    k_act, k_arg, k_par = jax.random.split(key, 3)
    action_embeds = jax.random.normal(k_act, (B, SEQ, HIDDEN), jnp.float32)
    argument_embeds = jax.random.normal(k_arg, (B, SEQ, HIDDEN), jnp.float32)
    params = make_params(k_par)

    out = torso_forward(action_embeds, argument_embeds, params)
    out = jax.block_until_ready(out)

    ref = reference(action_embeds, argument_embeds, params)
    assert out.shape == (B, SEQ, HEAD_H)
    # Relative-norm check: tolerant of MXU default-precision (bf16-pass) drift
    # between in-kernel dots and the XLA reference dots; structural bugs
    # (wrong gate order / layout) would give O(1) relative error.
    rel_err = float(jnp.linalg.norm(out - ref) / jnp.linalg.norm(ref))
    assert rel_err < 2e-2, f"relative error {rel_err} too large vs. reference"
    print("KERNEL_OK")
</pallas_src>

<mosaic_0001>
module attributes {stable_mosaic.version = 11 : i64} {
  func.func @torso_lstm_kernel(%arg0: memref<16x32xf32, #tpu.memory_space<vmem>>, %arg1: memref<16x32xf32, #tpu.memory_space<vmem>>, %arg2: memref<32x32xf32, #tpu.memory_space<vmem>>, %arg3: memref<1x32xf32, #tpu.memory_space<vmem>>, %arg4: memref<2x32x128xf32, #tpu.memory_space<vmem>>, %arg5: memref<2x32x128xf32, #tpu.memory_space<vmem>>, %arg6: memref<2x1x128xf32, #tpu.memory_space<vmem>>, %arg7: memref<32x32xf32, #tpu.memory_space<vmem>>, %arg8: memref<1x32xf32, #tpu.memory_space<vmem>>, %arg9: memref<16x32xf32, #tpu.memory_space<vmem>>) attributes {dimension_semantics = [], scalar_prefetch = 0 : i64, scratch_operands = 0 : i64, tpu.core_type = #tpu.core_type<tc>} {
    %c0 = arith.constant 0 : index
    %c0_0 = arith.constant 0 : index
    %0 = vector.load %arg0[%c0, %c0_0] : memref<16x32xf32, #tpu.memory_space<vmem>>, vector<16x32xf32>
    %c0_1 = arith.constant 0 : index
    %c0_2 = arith.constant 0 : index
    %1 = vector.load %arg1[%c0_1, %c0_2] : memref<16x32xf32, #tpu.memory_space<vmem>>, vector<16x32xf32>
    %2 = arith.addf %0, %1 : vector<16x32xf32>
    %c0_3 = arith.constant 0 : index
    %c0_4 = arith.constant 0 : index
    %3 = vector.load %arg2[%c0_3, %c0_4] : memref<32x32xf32, #tpu.memory_space<vmem>>, vector<32x32xf32>
    %cst = arith.constant dense<0.000000e+00> : vector<16x32xf32>
    %4 = tpu.matmul %2, %3, %cst {dimension_numbers = #tpu.dot_dimension_numbers<[1], [0], [0], [1], [0, 0, 1, 1], [], []>} : vector<16x32xf32>, vector<32x32xf32>, vector<16x32xf32> -> vector<16x32xf32>
    %c0_5 = arith.constant 0 : index
    %c0_6 = arith.constant 0 : index
    %5 = vector.load %arg3[%c0_5, %c0_6] : memref<1x32xf32, #tpu.memory_space<vmem>>, vector<1x32xf32>
    %6 = vector.broadcast %5 : vector<1x32xf32> to vector<16x32xf32>
    %7 = arith.addf %4, %6 : vector<16x32xf32>
    %c0_7 = arith.constant 0 : index
    %c0_8 = arith.constant 0 : index
    %c0_9 = arith.constant 0 : index
    %8 = vector.load %arg4[%c0_7, %c0_8, %c0_9] : memref<2x32x128xf32, #tpu.memory_space<vmem>>, vector<1x32x128xf32>
    %9 = vector.shape_cast %8 : vector<1x32x128xf32> to vector<32x128xf32>
    %cst_10 = arith.constant dense<0.000000e+00> : vector<16x128xf32>
    %10 = tpu.matmul %7, %9, %cst_10 {dimension_numbers = #tpu.dot_dimension_numbers<[1], [0], [0], [1], [0, 0, 1, 1], [], []>} : vector<16x32xf32>, vector<32x128xf32>, vector<16x128xf32> -> vector<16x128xf32>
    %c0_11 = arith.constant 0 : index
    %c0_12 = arith.constant 0 : index
    %c0_13 = arith.constant 0 : index
    %11 = vector.load %arg6[%c0_11, %c0_12, %c0_13] : memref<2x1x128xf32, #tpu.memory_space<vmem>>, vector<1x1x128xf32>
    %12 = vector.shape_cast %11 : vector<1x1x128xf32> to vector<1x128xf32>
    %13 = vector.broadcast %12 : vector<1x128xf32> to vector<16x128xf32>
    %14 = arith.addf %10, %13 : vector<16x128xf32>
    %c0_14 = arith.constant 0 : index
    %c0_15 = arith.constant 0 : index
    %c0_16 = arith.constant 0 : index
    %15 = vector.load %arg5[%c0_14, %c0_15, %c0_16] : memref<2x32x128xf32, #tpu.memory_space<vmem>>, vector<1x32x128xf32>
    %16 = vector.shape_cast %15 : vector<1x32x128xf32> to vector<32x128xf32>
    %cst_17 = arith.constant 0.000000e+00 : f32
    %17 = vector.broadcast %cst_17 : f32 to vector<2x32xf32>
    %cst_18 = arith.constant 0.000000e+00 : f32
    %18 = vector.broadcast %cst_18 : f32 to vector<2x32xf32>
    %19 = vector.extract_strided_slice %14 {offsets = [0, 0], sizes = [2, 128], strides = [1, 1]} : vector<16x128xf32> to vector<2x128xf32>
    %cst_19 = arith.constant dense<0.000000e+00> : vector<2x128xf32>
    %20 = tpu.matmul %17, %16, %cst_19 {dimension_numbers = #tpu.dot_dimension_numbers<[1], [0], [0], [1], [0, 0, 1, 1], [], []>} : vector<2x32xf32>, vector<32x128xf32>, vector<2x128xf32> -> vector<2x128xf32>
    %21 = arith.addf %19, %20 : vector<2x128xf32>
    %22 = arith.negf %21 : vector<2x128xf32>
    %23 = math.exp %22 : vector<2x128xf32>
    %cst_20 = arith.constant 1.000000e+00 : f32
    %24 = vector.broadcast %cst_20 : f32 to vector<2x128xf32>
    %25 = arith.addf %24, %23 : vector<2x128xf32>
    %26 = arith.divf %24, %25 : vector<2x128xf32>
    %27 = vector.extract_strided_slice %21 {offsets = [0, 64], sizes = [2, 32], strides = [1, 1]} : vector<2x128xf32> to vector<2x32xf32>
    %28 = math.tanh %27 : vector<2x32xf32>
    %29 = vector.extract_strided_slice %26 {offsets = [0, 32], sizes = [2, 32], strides = [1, 1]} : vector<2x128xf32> to vector<2x32xf32>
    %30 = arith.mulf %29, %18 : vector<2x32xf32>
    %31 = vector.extract_strided_slice %26 {offsets = [0, 0], sizes = [2, 32], strides = [1, 1]} : vector<2x128xf32> to vector<2x32xf32>
    %32 = arith.mulf %31, %28 : vector<2x32xf32>
    %33 = arith.addf %30, %32 : vector<2x32xf32>
    %34 = vector.extract_strided_slice %26 {offsets = [0, 96], sizes = [2, 32], strides = [1, 1]} : vector<2x128xf32> to vector<2x32xf32>
    %35 = math.tanh %33 : vector<2x32xf32>
    %36 = arith.mulf %34, %35 : vector<2x32xf32>
    %37 = vector.extract_strided_slice %14 {offsets = [2, 0], sizes = [2, 128], strides = [1, 1]} : vector<16x128xf32> to vector<2x128xf32>
    %cst_21 = arith.constant dense<0.000000e+00> : vector<2x128xf32>
    %38 = tpu.matmul %36, %16, %cst_21 {dimension_numbers = #tpu.dot_dimension_numbers<[1], [0], [0], [1], [0, 0, 1, 1], [], []>} : vector<2x32xf32>, vector<32x128xf32>, vector<2x128xf32> -> vector<2x128xf32>
    %39 = arith.addf %37, %38 : vector<2x128xf32>
    %40 = arith.negf %39 : vector<2x128xf32>
    %41 = math.exp %40 : vector<2x128xf32>
    %cst_22 = arith.constant 1.000000e+00 : f32
    %42 = vector.broadcast %cst_22 : f32 to vector<2x128xf32>
    %43 = arith.addf %42, %41 : vector<2x128xf32>
    %44 = arith.divf %42, %43 : vector<2x128xf32>
    %45 = vector.extract_strided_slice %39 {offsets = [0, 64], sizes = [2, 32], strides = [1, 1]} : vector<2x128xf32> to vector<2x32xf32>
    %46 = math.tanh %45 : vector<2x32xf32>
    %47 = vector.extract_strided_slice %44 {offsets = [0, 32], sizes = [2, 32], strides = [1, 1]} : vector<2x128xf32> to vector<2x32xf32>
    %48 = arith.mulf %47, %33 : vector<2x32xf32>
    %49 = vector.extract_strided_slice %44 {offsets = [0, 0], sizes = [2, 32], strides = [1, 1]} : vector<2x128xf32> to vector<2x32xf32>
    %50 = arith.mulf %49, %46 : vector<2x32xf32>
    %51 = arith.addf %48, %50 : vector<2x32xf32>
    %52 = vector.extract_strided_slice %44 {offsets = [0, 96], sizes = [2, 32], strides = [1, 1]} : vector<2x128xf32> to vector<2x32xf32>
    %53 = math.tanh %51 : vector<2x32xf32>
    %54 = arith.mulf %52, %53 : vector<2x32xf32>
    %55 = vector.extract_strided_slice %14 {offsets = [4, 0], sizes = [2, 128], strides = [1, 1]} : vector<16x128xf32> to vector<2x128xf32>
    %cst_23 = arith.constant dense<0.000000e+00> : vector<2x128xf32>
    %56 = tpu.matmul %54, %16, %cst_23 {dimension_numbers = #tpu.dot_dimension_numbers<[1], [0], [0], [1], [0, 0, 1, 1], [], []>} : vector<2x32xf32>, vector<32x128xf32>, vector<2x128xf32> -> vector<2x128xf32>
    %57 = arith.addf %55, %56 : vector<2x128xf32>
    %58 = arith.negf %57 : vector<2x128xf32>
    %59 = math.exp %58 : vector<2x128xf32>
    %cst_24 = arith.constant 1.000000e+00 : f32
    %60 = vector.broadcast %cst_24 : f32 to vector<2x128xf32>
    %61 = arith.addf %60, %59 : vector<2x128xf32>
    %62 = arith.divf %60, %61 : vector<2x128xf32>
    %63 = vector.extract_strided_slice %57 {offsets = [0, 64], sizes = [2, 32], strides = [1, 1]} : vector<2x128xf32> to vector<2x32xf32>
    %64 = math.tanh %63 : vector<2x32xf32>
    %65 = vector.extract_strided_slice %62 {offsets = [0, 32], sizes = [2, 32], strides = [1, 1]} : vector<2x128xf32> to vector<2x32xf32>
    %66 = arith.mulf %65, %51 : vector<2x32xf32>
    %67 = vector.extract_strided_slice %62 {offsets = [0, 0], sizes = [2, 32], strides = [1, 1]} : vector<2x128xf32> to vector<2x32xf32>
    %68 = arith.mulf %67, %64 : vector<2x32xf32>
    %69 = arith.addf %66, %68 : vector<2x32xf32>
    %70 = vector.extract_strided_slice %62 {offsets = [0, 96], sizes = [2, 32], strides = [1, 1]} : vector<2x128xf32> to vector<2x32xf32>
    %71 = math.tanh %69 : vector<2x32xf32>
    %72 = arith.mulf %70, %71 : vector<2x32xf32>
    %73 = vector.extract_strided_slice %14 {offsets = [6, 0], sizes = [2, 128], strides = [1, 1]} : vector<16x128xf32> to vector<2x128xf32>
    %cst_25 = arith.constant dense<0.000000e+00> : vector<2x128xf32>
    %74 = tpu.matmul %72, %16, %cst_25 {dimension_numbers = #tpu.dot_dimension_numbers<[1], [0], [0], [1], [0, 0, 1, 1], [], []>} : vector<2x32xf32>, vector<32x128xf32>, vector<2x128xf32> -> vector<2x128xf32>
    %75 = arith.addf %73, %74 : vector<2x128xf32>
    %76 = arith.negf %75 : vector<2x128xf32>
    %77 = math.exp %76 : vector<2x128xf32>
    %cst_26 = arith.constant 1.000000e+00 : f32
    %78 = vector.broadcast %cst_26 : f32 to vector<2x128xf32>
    %79 = arith.addf %78, %77 : vector<2x128xf32>
    %80 = arith.divf %78, %79 : vector<2x128xf32>
    %81 = vector.extract_strided_slice %75 {offsets = [0, 64], sizes = [2, 32], strides = [1, 1]} : vector<2x128xf32> to vector<2x32xf32>
    %82 = math.tanh %81 : vector<2x32xf32>
    %83 = vector.extract_strided_slice %80 {offsets = [0, 32], sizes = [2, 32], strides = [1, 1]} : vector<2x128xf32> to vector<2x32xf32>
    %84 = arith.mulf %83, %69 : vector<2x32xf32>
    %85 = vector.extract_strided_slice %80 {offsets = [0, 0], sizes = [2, 32], strides = [1, 1]} : vector<2x128xf32> to vector<2x32xf32>
    %86 = arith.mulf %85, %82 : vector<2x32xf32>
    %87 = arith.addf %84, %86 : vector<2x32xf32>
    %88 = vector.extract_strided_slice %80 {offsets = [0, 96], sizes = [2, 32], strides = [1, 1]} : vector<2x128xf32> to vector<2x32xf32>
    %89 = math.tanh %87 : vector<2x32xf32>
    %90 = arith.mulf %88, %89 : vector<2x32xf32>
    %91 = vector.extract_strided_slice %14 {offsets = [8, 0], sizes = [2, 128], strides = [1, 1]} : vector<16x128xf32> to vector<2x128xf32>
    %cst_27 = arith.constant dense<0.000000e+00> : vector<2x128xf32>
    %92 = tpu.matmul %90, %16, %cst_27 {dimension_numbers = #tpu.dot_dimension_numbers<[1], [0], [0], [1], [0, 0, 1, 1], [], []>} : vector<2x32xf32>, vector<32x128xf32>, vector<2x128xf32> -> vector<2x128xf32>
    %93 = arith.addf %91, %92 : vector<2x128xf32>
    %94 = arith.negf %93 : vector<2x128xf32>
    %95 = math.exp %94 : vector<2x128xf32>
    %cst_28 = arith.constant 1.000000e+00 : f32
    %96 = vector.broadcast %cst_28 : f32 to vector<2x128xf32>
    %97 = arith.addf %96, %95 : vector<2x128xf32>
    %98 = arith.divf %96, %97 : vector<2x128xf32>
    %99 = vector.extract_strided_slice %93 {offsets = [0, 64], sizes = [2, 32], strides = [1, 1]} : vector<2x128xf32> to vector<2x32xf32>
    %100 = math.tanh %99 : vector<2x32xf32>
    %101 = vector.extract_strided_slice %98 {offsets = [0, 32], sizes = [2, 32], strides = [1, 1]} : vector<2x128xf32> to vector<2x32xf32>
    %102 = arith.mulf %101, %87 : vector<2x32xf32>
    %103 = vector.extract_strided_slice %98 {offsets = [0, 0], sizes = [2, 32], strides = [1, 1]} : vector<2x128xf32> to vector<2x32xf32>
    %104 = arith.mulf %103, %100 : vector<2x32xf32>
    %105 = arith.addf %102, %104 : vector<2x32xf32>
    %106 = vector.extract_strided_slice %98 {offsets = [0, 96], sizes = [2, 32], strides = [1, 1]} : vector<2x128xf32> to vector<2x32xf32>
    %107 = math.tanh %105 : vector<2x32xf32>
    %108 = arith.mulf %106, %107 : vector<2x32xf32>
    %109 = vector.extract_strided_slice %14 {offsets = [10, 0], sizes = [2, 128], strides = [1, 1]} : vector<16x128xf32> to vector<2x128xf32>
    %cst_29 = arith.constant dense<0.000000e+00> : vector<2x128xf32>
    %110 = tpu.matmul %108, %16, %cst_29 {dimension_numbers = #tpu.dot_dimension_numbers<[1], [0], [0], [1], [0, 0, 1, 1], [], []>} : vector<2x32xf32>, vector<32x128xf32>, vector<2x128xf32> -> vector<2x128xf32>
    %111 = arith.addf %109, %110 : vector<2x128xf32>
    %112 = arith.negf %111 : vector<2x128xf32>
    %113 = math.exp %112 : vector<2x128xf32>
    %cst_30 = arith.constant 1.000000e+00 : f32
    %114 = vector.broadcast %cst_30 : f32 to vector<2x128xf32>
    %115 = arith.addf %114, %113 : vector<2x128xf32>
    %116 = arith.divf %114, %115 : vector<2x128xf32>
    %117 = vector.extract_strided_slice %111 {offsets = [0, 64], sizes = [2, 32], strides = [1, 1]} : vector<2x128xf32> to vector<2x32xf32>
    %118 = math.tanh %117 : vector<2x32xf32>
    %119 = vector.extract_strided_slice %116 {offsets = [0, 32], sizes = [2, 32], strides = [1, 1]} : vector<2x128xf32> to vector<2x32xf32>
    %120 = arith.mulf %119, %105 : vector<2x32xf32>
    %121 = vector.extract_strided_slice %116 {offsets = [0, 0], sizes = [2, 32], strides = [1, 1]} : vector<2x128xf32> to vector<2x32xf32>
    %122 = arith.mulf %121, %118 : vector<2x32xf32>
    %123 = arith.addf %120, %122 : vector<2x32xf32>
    %124 = vector.extract_strided_slice %116 {offsets = [0, 96], sizes = [2, 32], strides = [1, 1]} : vector<2x128xf32> to vector<2x32xf32>
    %125 = math.tanh %123 : vector<2x32xf32>
    %126 = arith.mulf %124, %125 : vector<2x32xf32>
    %127 = vector.extract_strided_slice %14 {offsets = [12, 0], sizes = [2, 128], strides = [1, 1]} : vector<16x128xf32> to vector<2x128xf32>
    %cst_31 = arith.constant dense<0.000000e+00> : vector<2x128xf32>
    %128 = tpu.matmul %126, %16, %cst_31 {dimension_numbers = #tpu.dot_dimension_numbers<[1], [0], [0], [1], [0, 0, 1, 1], [], []>} : vector<2x32xf32>, vector<32x128xf32>, vector<2x128xf32> -> vector<2x128xf32>
    %129 = arith.addf %127, %128 : vector<2x128xf32>
    %130 = arith.negf %129 : vector<2x128xf32>
    %131 = math.exp %130 : vector<2x128xf32>
    %cst_32 = arith.constant 1.000000e+00 : f32
    %132 = vector.broadcast %cst_32 : f32 to vector<2x128xf32>
    %133 = arith.addf %132, %131 : vector<2x128xf32>
    %134 = arith.divf %132, %133 : vector<2x128xf32>
    %135 = vector.extract_strided_slice %129 {offsets = [0, 64], sizes = [2, 32], strides = [1, 1]} : vector<2x128xf32> to vector<2x32xf32>
    %136 = math.tanh %135 : vector<2x32xf32>
    %137 = vector.extract_strided_slice %134 {offsets = [0, 32], sizes = [2, 32], strides = [1, 1]} : vector<2x128xf32> to vector<2x32xf32>
    %138 = arith.mulf %137, %123 : vector<2x32xf32>
    %139 = vector.extract_strided_slice %134 {offsets = [0, 0], sizes = [2, 32], strides = [1, 1]} : vector<2x128xf32> to vector<2x32xf32>
    %140 = arith.mulf %139, %136 : vector<2x32xf32>
    %141 = arith.addf %138, %140 : vector<2x32xf32>
    %142 = vector.extract_strided_slice %134 {offsets = [0, 96], sizes = [2, 32], strides = [1, 1]} : vector<2x128xf32> to vector<2x32xf32>
    %143 = math.tanh %141 : vector<2x32xf32>
    %144 = arith.mulf %142, %143 : vector<2x32xf32>
    %145 = vector.extract_strided_slice %14 {offsets = [14, 0], sizes = [2, 128], strides = [1, 1]} : vector<16x128xf32> to vector<2x128xf32>
    %cst_33 = arith.constant dense<0.000000e+00> : vector<2x128xf32>
    %146 = tpu.matmul %144, %16, %cst_33 {dimension_numbers = #tpu.dot_dimension_numbers<[1], [0], [0], [1], [0, 0, 1, 1], [], []>} : vector<2x32xf32>, vector<32x128xf32>, vector<2x128xf32> -> vector<2x128xf32>
    %147 = arith.addf %145, %146 : vector<2x128xf32>
    %148 = arith.negf %147 : vector<2x128xf32>
    %149 = math.exp %148 : vector<2x128xf32>
    %cst_34 = arith.constant 1.000000e+00 : f32
    %150 = vector.broadcast %cst_34 : f32 to vector<2x128xf32>
    %151 = arith.addf %150, %149 : vector<2x128xf32>
    %152 = arith.divf %150, %151 : vector<2x128xf32>
    %153 = vector.extract_strided_slice %147 {offsets = [0, 64], sizes = [2, 32], strides = [1, 1]} : vector<2x128xf32> to vector<2x32xf32>
    %154 = math.tanh %153 : vector<2x32xf32>
    %155 = vector.extract_strided_slice %152 {offsets = [0, 32], sizes = [2, 32], strides = [1, 1]} : vector<2x128xf32> to vector<2x32xf32>
    %156 = arith.mulf %155, %141 : vector<2x32xf32>
    %157 = vector.extract_strided_slice %152 {offsets = [0, 0], sizes = [2, 32], strides = [1, 1]} : vector<2x128xf32> to vector<2x32xf32>
    %158 = arith.mulf %157, %154 : vector<2x32xf32>
    %159 = arith.addf %156, %158 : vector<2x32xf32>
    %160 = vector.extract_strided_slice %152 {offsets = [0, 96], sizes = [2, 32], strides = [1, 1]} : vector<2x128xf32> to vector<2x32xf32>
    %161 = math.tanh %159 : vector<2x32xf32>
    %162 = arith.mulf %160, %161 : vector<2x32xf32>
    %163 = tpu.concatenate %36, %54, %72, %90, %108, %126, %144, %162 in 0 : vector<2x32xf32>, vector<2x32xf32>, vector<2x32xf32>, vector<2x32xf32>, vector<2x32xf32>, vector<2x32xf32>, vector<2x32xf32>, vector<2x32xf32> -> vector<16x32xf32>
    %c1 = arith.constant 1 : index
    %c0_35 = arith.constant 0 : index
    %c0_36 = arith.constant 0 : index
    %164 = vector.load %arg4[%c1, %c0_35, %c0_36] : memref<2x32x128xf32, #tpu.memory_space<vmem>>, vector<1x32x128xf32>
    %165 = vector.shape_cast %164 : vector<1x32x128xf32> to vector<32x128xf32>
    %cst_37 = arith.constant dense<0.000000e+00> : vector<16x128xf32>
    %166 = tpu.matmul %163, %165, %cst_37 {dimension_numbers = #tpu.dot_dimension_numbers<[1], [0], [0], [1], [0, 0, 1, 1], [], []>} : vector<16x32xf32>, vector<32x128xf32>, vector<16x128xf32> -> vector<16x128xf32>
    %c1_38 = arith.constant 1 : index
    %c0_39 = arith.constant 0 : index
    %c0_40 = arith.constant 0 : index
    %167 = vector.load %arg6[%c1_38, %c0_39, %c0_40] : memref<2x1x128xf32, #tpu.memory_space<vmem>>, vector<1x1x128xf32>
    %168 = vector.shape_cast %167 : vector<1x1x128xf32> to vector<1x128xf32>
    %169 = vector.broadcast %168 : vector<1x128xf32> to vector<16x128xf32>
    %170 = arith.addf %166, %169 : vector<16x128xf32>
    %c1_41 = arith.constant 1 : index
    %c0_42 = arith.constant 0 : index
    %c0_43 = arith.constant 0 : index
    %171 = vector.load %arg5[%c1_41, %c0_42, %c0_43] : memref<2x32x128xf32, #tpu.memory_space<vmem>>, vector<1x32x128xf32>
    %172 = vector.shape_cast %171 : vector<1x32x128xf32> to vector<32x128xf32>
    %cst_44 = arith.constant 0.000000e+00 : f32
    %173 = vector.broadcast %cst_44 : f32 to vector<2x32xf32>
    %cst_45 = arith.constant 0.000000e+00 : f32
    %174 = vector.broadcast %cst_45 : f32 to vector<2x32xf32>
    %175 = vector.extract_strided_slice %170 {offsets = [0, 0], sizes = [2, 128], strides = [1, 1]} : vector<16x128xf32> to vector<2x128xf32>
    %cst_46 = arith.constant dense<0.000000e+00> : vector<2x128xf32>
    %176 = tpu.matmul %173, %172, %cst_46 {dimension_numbers = #tpu.dot_dimension_numbers<[1], [0], [0], [1], [0, 0, 1, 1], [], []>} : vector<2x32xf32>, vector<32x128xf32>, vector<2x128xf32> -> vector<2x128xf32>
    %177 = arith.addf %175, %176 : vector<2x128xf32>
    %178 = arith.negf %177 : vector<2x128xf32>
    %179 = math.exp %178 : vector<2x128xf32>
    %cst_47 = arith.constant 1.000000e+00 : f32
    %180 = vector.broadcast %cst_47 : f32 to vector<2x128xf32>
    %181 = arith.addf %180, %179 : vector<2x128xf32>
    %182 = arith.divf %180, %181 : vector<2x128xf32>
    %183 = vector.extract_strided_slice %177 {offsets = [0, 64], sizes = [2, 32], strides = [1, 1]} : vector<2x128xf32> to vector<2x32xf32>
    %184 = math.tanh %183 : vector<2x32xf32>
    %185 = vector.extract_strided_slice %182 {offsets = [0, 32], sizes = [2, 32], strides = [1, 1]} : vector<2x128xf32> to vector<2x32xf32>
    %186 = arith.mulf %185, %174 : vector<2x32xf32>
    %187 = vector.extract_strided_slice %182 {offsets = [0, 0], sizes = [2, 32], strides = [1, 1]} : vector<2x128xf32> to vector<2x32xf32>
    %188 = arith.mulf %187, %184 : vector<2x32xf32>
    %189 = arith.addf %186, %188 : vector<2x32xf32>
    %190 = vector.extract_strided_slice %182 {offsets = [0, 96], sizes = [2, 32], strides = [1, 1]} : vector<2x128xf32> to vector<2x32xf32>
    %191 = math.tanh %189 : vector<2x32xf32>
    %192 = arith.mulf %190, %191 : vector<2x32xf32>
    %193 = vector.extract_strided_slice %170 {offsets = [2, 0], sizes = [2, 128], strides = [1, 1]} : vector<16x128xf32> to vector<2x128xf32>
    %cst_48 = arith.constant dense<0.000000e+00> : vector<2x128xf32>
    %194 = tpu.matmul %192, %172, %cst_48 {dimension_numbers = #tpu.dot_dimension_numbers<[1], [0], [0], [1], [0, 0, 1, 1], [], []>} : vector<2x32xf32>, vector<32x128xf32>, vector<2x128xf32> -> vector<2x128xf32>
    %195 = arith.addf %193, %194 : vector<2x128xf32>
    %196 = arith.negf %195 : vector<2x128xf32>
    %197 = math.exp %196 : vector<2x128xf32>
    %cst_49 = arith.constant 1.000000e+00 : f32
    %198 = vector.broadcast %cst_49 : f32 to vector<2x128xf32>
    %199 = arith.addf %198, %197 : vector<2x128xf32>
    %200 = arith.divf %198, %199 : vector<2x128xf32>
    %201 = vector.extract_strided_slice %195 {offsets = [0, 64], sizes = [2, 32], strides = [1, 1]} : vector<2x128xf32> to vector<2x32xf32>
    %202 = math.tanh %201 : vector<2x32xf32>
    %203 = vector.extract_strided_slice %200 {offsets = [0, 32], sizes = [2, 32], strides = [1, 1]} : vector<2x128xf32> to vector<2x32xf32>
    %204 = arith.mulf %203, %189 : vector<2x32xf32>
    %205 = vector.extract_strided_slice %200 {offsets = [0, 0], sizes = [2, 32], strides = [1, 1]} : vector<2x128xf32> to vector<2x32xf32>
    %206 = arith.mulf %205, %202 : vector<2x32xf32>
    %207 = arith.addf %204, %206 : vector<2x32xf32>
    %208 = vector.extract_strided_slice %200 {offsets = [0, 96], sizes = [2, 32], strides = [1, 1]} : vector<2x128xf32> to vector<2x32xf32>
    %209 = math.tanh %207 : vector<2x32xf32>
    %210 = arith.mulf %208, %209 : vector<2x32xf32>
    %211 = vector.extract_strided_slice %170 {offsets = [4, 0], sizes = [2, 128], strides = [1, 1]} : vector<16x128xf32> to vector<2x128xf32>
    %cst_50 = arith.constant dense<0.000000e+00> : vector<2x128xf32>
    %212 = tpu.matmul %210, %172, %cst_50 {dimension_numbers = #tpu.dot_dimension_numbers<[1], [0], [0], [1], [0, 0, 1, 1], [], []>} : vector<2x32xf32>, vector<32x128xf32>, vector<2x128xf32> -> vector<2x128xf32>
    %213 = arith.addf %211, %212 : vector<2x128xf32>
    %214 = arith.negf %213 : vector<2x128xf32>
    %215 = math.exp %214 : vector<2x128xf32>
    %cst_51 = arith.constant 1.000000e+00 : f32
    %216 = vector.broadcast %cst_51 : f32 to vector<2x128xf32>
    %217 = arith.addf %216, %215 : vector<2x128xf32>
    %218 = arith.divf %216, %217 : vector<2x128xf32>
    %219 = vector.extract_strided_slice %213 {offsets = [0, 64], sizes = [2, 32], strides = [1, 1]} : vector<2x128xf32> to vector<2x32xf32>
    %220 = math.tanh %219 : vector<2x32xf32>
    %221 = vector.extract_strided_slice %218 {offsets = [0, 32], sizes = [2, 32], strides = [1, 1]} : vector<2x128xf32> to vector<2x32xf32>
    %222 = arith.mulf %221, %207 : vector<2x32xf32>
    %223 = vector.extract_strided_slice %218 {offsets = [0, 0], sizes = [2, 32], strides = [1, 1]} : vector<2x128xf32> to vector<2x32xf32>
    %224 = arith.mulf %223, %220 : vector<2x32xf32>
    %225 = arith.addf %222, %224 : vector<2x32xf32>
    %226 = vector.extract_strided_slice %218 {offsets = [0, 96], sizes = [2, 32], strides = [1, 1]} : vector<2x128xf32> to vector<2x32xf32>
    %227 = math.tanh %225 : vector<2x32xf32>
    %228 = arith.mulf %226, %227 : vector<2x32xf32>
    %229 = vector.extract_strided_slice %170 {offsets = [6, 0], sizes = [2, 128], strides = [1, 1]} : vector<16x128xf32> to vector<2x128xf32>
    %cst_52 = arith.constant dense<0.000000e+00> : vector<2x128xf32>
    %230 = tpu.matmul %228, %172, %cst_52 {dimension_numbers = #tpu.dot_dimension_numbers<[1], [0], [0], [1], [0, 0, 1, 1], [], []>} : vector<2x32xf32>, vector<32x128xf32>, vector<2x128xf32> -> vector<2x128xf32>
    %231 = arith.addf %229, %230 : vector<2x128xf32>
    %232 = arith.negf %231 : vector<2x128xf32>
    %233 = math.exp %232 : vector<2x128xf32>
    %cst_53 = arith.constant 1.000000e+00 : f32
    %234 = vector.broadcast %cst_53 : f32 to vector<2x128xf32>
    %235 = arith.addf %234, %233 : vector<2x128xf32>
    %236 = arith.divf %234, %235 : vector<2x128xf32>
    %237 = vector.extract_strided_slice %231 {offsets = [0, 64], sizes = [2, 32], strides = [1, 1]} : vector<2x128xf32> to vector<2x32xf32>
    %238 = math.tanh %237 : vector<2x32xf32>
    %239 = vector.extract_strided_slice %236 {offsets = [0, 32], sizes = [2, 32], strides = [1, 1]} : vector<2x128xf32> to vector<2x32xf32>
    %240 = arith.mulf %239, %225 : vector<2x32xf32>
    %241 = vector.extract_strided_slice %236 {offsets = [0, 0], sizes = [2, 32], strides = [1, 1]} : vector<2x128xf32> to vector<2x32xf32>
    %242 = arith.mulf %241, %238 : vector<2x32xf32>
    %243 = arith.addf %240, %242 : vector<2x32xf32>
    %244 = vector.extract_strided_slice %236 {offsets = [0, 96], sizes = [2, 32], strides = [1, 1]} : vector<2x128xf32> to vector<2x32xf32>
    %245 = math.tanh %243 : vector<2x32xf32>
    %246 = arith.mulf %244, %245 : vector<2x32xf32>
    %247 = vector.extract_strided_slice %170 {offsets = [8, 0], sizes = [2, 128], strides = [1, 1]} : vector<16x128xf32> to vector<2x128xf32>
    %cst_54 = arith.constant dense<0.000000e+00> : vector<2x128xf32>
    %248 = tpu.matmul %246, %172, %cst_54 {dimension_numbers = #tpu.dot_dimension_numbers<[1], [0], [0], [1], [0, 0, 1, 1], [], []>} : vector<2x32xf32>, vector<32x128xf32>, vector<2x128xf32> -> vector<2x128xf32>
    %249 = arith.addf %247, %248 : vector<2x128xf32>
    %250 = arith.negf %249 : vector<2x128xf32>
    %251 = math.exp %250 : vector<2x128xf32>
    %cst_55 = arith.constant 1.000000e+00 : f32
    %252 = vector.broadcast %cst_55 : f32 to vector<2x128xf32>
    %253 = arith.addf %252, %251 : vector<2x128xf32>
    %254 = arith.divf %252, %253 : vector<2x128xf32>
    %255 = vector.extract_strided_slice %249 {offsets = [0, 64], sizes = [2, 32], strides = [1, 1]} : vector<2x128xf32> to vector<2x32xf32>
    %256 = math.tanh %255 : vector<2x32xf32>
    %257 = vector.extract_strided_slice %254 {offsets = [0, 32], sizes = [2, 32], strides = [1, 1]} : vector<2x128xf32> to vector<2x32xf32>
    %258 = arith.mulf %257, %243 : vector<2x32xf32>
    %259 = vector.extract_strided_slice %254 {offsets = [0, 0], sizes = [2, 32], strides = [1, 1]} : vector<2x128xf32> to vector<2x32xf32>
    %260 = arith.mulf %259, %256 : vector<2x32xf32>
    %261 = arith.addf %258, %260 : vector<2x32xf32>
    %262 = vector.extract_strided_slice %254 {offsets = [0, 96], sizes = [2, 32], strides = [1, 1]} : vector<2x128xf32> to vector<2x32xf32>
    %263 = math.tanh %261 : vector<2x32xf32>
    %264 = arith.mulf %262, %263 : vector<2x32xf32>
    %265 = vector.extract_strided_slice %170 {offsets = [10, 0], sizes = [2, 128], strides = [1, 1]} : vector<16x128xf32> to vector<2x128xf32>
    %cst_56 = arith.constant dense<0.000000e+00> : vector<2x128xf32>
    %266 = tpu.matmul %264, %172, %cst_56 {dimension_numbers = #tpu.dot_dimension_numbers<[1], [0], [0], [1], [0, 0, 1, 1], [], []>} : vector<2x32xf32>, vector<32x128xf32>, vector<2x128xf32> -> vector<2x128xf32>
    %267 = arith.addf %265, %266 : vector<2x128xf32>
    %268 = arith.negf %267 : vector<2x128xf32>
    %269 = math.exp %268 : vector<2x128xf32>
    %cst_57 = arith.constant 1.000000e+00 : f32
    %270 = vector.broadcast %cst_57 : f32 to vector<2x128xf32>
    %271 = arith.addf %270, %269 : vector<2x128xf32>
    %272 = arith.divf %270, %271 : vector<2x128xf32>
    %273 = vector.extract_strided_slice %267 {offsets = [0, 64], sizes = [2, 32], strides = [1, 1]} : vector<2x128xf32> to vector<2x32xf32>
    %274 = math.tanh %273 : vector<2x32xf32>
    %275 = vector.extract_strided_slice %272 {offsets = [0, 32], sizes = [2, 32], strides = [1, 1]} : vector<2x128xf32> to vector<2x32xf32>
    %276 = arith.mulf %275, %261 : vector<2x32xf32>
    %277 = vector.extract_strided_slice %272 {offsets = [0, 0], sizes = [2, 32], strides = [1, 1]} : vector<2x128xf32> to vector<2x32xf32>
    %278 = arith.mulf %277, %274 : vector<2x32xf32>
    %279 = arith.addf %276, %278 : vector<2x32xf32>
    %280 = vector.extract_strided_slice %272 {offsets = [0, 96], sizes = [2, 32], strides = [1, 1]} : vector<2x128xf32> to vector<2x32xf32>
    %281 = math.tanh %279 : vector<2x32xf32>
    %282 = arith.mulf %280, %281 : vector<2x32xf32>
    %283 = vector.extract_strided_slice %170 {offsets = [12, 0], sizes = [2, 128], strides = [1, 1]} : vector<16x128xf32> to vector<2x128xf32>
    %cst_58 = arith.constant dense<0.000000e+00> : vector<2x128xf32>
    %284 = tpu.matmul %282, %172, %cst_58 {dimension_numbers = #tpu.dot_dimension_numbers<[1], [0], [0], [1], [0, 0, 1, 1], [], []>} : vector<2x32xf32>, vector<32x128xf32>, vector<2x128xf32> -> vector<2x128xf32>
    %285 = arith.addf %283, %284 : vector<2x128xf32>
    %286 = arith.negf %285 : vector<2x128xf32>
    %287 = math.exp %286 : vector<2x128xf32>
    %cst_59 = arith.constant 1.000000e+00 : f32
    %288 = vector.broadcast %cst_59 : f32 to vector<2x128xf32>
    %289 = arith.addf %288, %287 : vector<2x128xf32>
    %290 = arith.divf %288, %289 : vector<2x128xf32>
    %291 = vector.extract_strided_slice %285 {offsets = [0, 64], sizes = [2, 32], strides = [1, 1]} : vector<2x128xf32> to vector<2x32xf32>
    %292 = math.tanh %291 : vector<2x32xf32>
    %293 = vector.extract_strided_slice %290 {offsets = [0, 32], sizes = [2, 32], strides = [1, 1]} : vector<2x128xf32> to vector<2x32xf32>
    %294 = arith.mulf %293, %279 : vector<2x32xf32>
    %295 = vector.extract_strided_slice %290 {offsets = [0, 0], sizes = [2, 32], strides = [1, 1]} : vector<2x128xf32> to vector<2x32xf32>
    %296 = arith.mulf %295, %292 : vector<2x32xf32>
    %297 = arith.addf %294, %296 : vector<2x32xf32>
    %298 = vector.extract_strided_slice %290 {offsets = [0, 96], sizes = [2, 32], strides = [1, 1]} : vector<2x128xf32> to vector<2x32xf32>
    %299 = math.tanh %297 : vector<2x32xf32>
    %300 = arith.mulf %298, %299 : vector<2x32xf32>
    %301 = vector.extract_strided_slice %170 {offsets = [14, 0], sizes = [2, 128], strides = [1, 1]} : vector<16x128xf32> to vector<2x128xf32>
    %cst_60 = arith.constant dense<0.000000e+00> : vector<2x128xf32>
    %302 = tpu.matmul %300, %172, %cst_60 {dimension_numbers = #tpu.dot_dimension_numbers<[1], [0], [0], [1], [0, 0, 1, 1], [], []>} : vector<2x32xf32>, vector<32x128xf32>, vector<2x128xf32> -> vector<2x128xf32>
    %303 = arith.addf %301, %302 : vector<2x128xf32>
    %304 = arith.negf %303 : vector<2x128xf32>
    %305 = math.exp %304 : vector<2x128xf32>
    %cst_61 = arith.constant 1.000000e+00 : f32
    %306 = vector.broadcast %cst_61 : f32 to vector<2x128xf32>
    %307 = arith.addf %306, %305 : vector<2x128xf32>
    %308 = arith.divf %306, %307 : vector<2x128xf32>
    %309 = vector.extract_strided_slice %303 {offsets = [0, 64], sizes = [2, 32], strides = [1, 1]} : vector<2x128xf32> to vector<2x32xf32>
    %310 = math.tanh %309 : vector<2x32xf32>
    %311 = vector.extract_strided_slice %308 {offsets = [0, 32], sizes = [2, 32], strides = [1, 1]} : vector<2x128xf32> to vector<2x32xf32>
    %312 = arith.mulf %311, %297 : vector<2x32xf32>
    %313 = vector.extract_strided_slice %308 {offsets = [0, 0], sizes = [2, 32], strides = [1, 1]} : vector<2x128xf32> to vector<2x32xf32>
    %314 = arith.mulf %313, %310 : vector<2x32xf32>
    %315 = arith.addf %312, %314 : vector<2x32xf32>
    %316 = vector.extract_strided_slice %308 {offsets = [0, 96], sizes = [2, 32], strides = [1, 1]} : vector<2x128xf32> to vector<2x32xf32>
    %317 = math.tanh %315 : vector<2x32xf32>
    %318 = arith.mulf %316, %317 : vector<2x32xf32>
    %319 = tpu.concatenate %192, %210, %228, %246, %264, %282, %300, %318 in 0 : vector<2x32xf32>, vector<2x32xf32>, vector<2x32xf32>, vector<2x32xf32>, vector<2x32xf32>, vector<2x32xf32>, vector<2x32xf32>, vector<2x32xf32> -> vector<16x32xf32>
    %c0_62 = arith.constant 0 : index
    %c0_63 = arith.constant 0 : index
    %320 = vector.load %arg7[%c0_62, %c0_63] : memref<32x32xf32, #tpu.memory_space<vmem>>, vector<32x32xf32>
    %cst_64 = arith.constant dense<0.000000e+00> : vector<16x32xf32>
    %321 = tpu.matmul %319, %320, %cst_64 {dimension_numbers = #tpu.dot_dimension_numbers<[1], [0], [0], [1], [0, 0, 1, 1], [], []>} : vector<16x32xf32>, vector<32x32xf32>, vector<16x32xf32> -> vector<16x32xf32>
    %c0_65 = arith.constant 0 : index
    %c0_66 = arith.constant 0 : index
    %322 = vector.load %arg8[%c0_65, %c0_66] : memref<1x32xf32, #tpu.memory_space<vmem>>, vector<1x32xf32>
    %323 = vector.broadcast %322 : vector<1x32xf32> to vector<16x32xf32>
    %324 = arith.addf %321, %323 : vector<16x32xf32>
    %c0_67 = arith.constant 0 : index
    %c0_68 = arith.constant 0 : index
    %325 = vector.load %arg9[%c0_67, %c0_68] : memref<16x32xf32, #tpu.memory_space<vmem>>, vector<16x32xf32>
    tpu.vector_store %arg9[%c0_67, %c0_68], %324 {strides = array<i32>} : memref<16x32xf32, #tpu.memory_space<vmem>>, vector<16x32xf32>,
    return
  }
}

</mosaic_0001>

<llo_original>
// kernel: torso_forward.1
$region0: #{torso_forward.1}
  #allocation0 [shape = 'u32[]', space=smem, size = 0x4, offset = 0x4, fixed_abs, tag = 'smem constant byte address 0x4 - core index']
  #allocation1 [shape = 'u32[72,128]{1,0:T(1,128)}', space=vmem, size = 0x9000, scoped, tag = 'internal scratch']
  %s0 = inlined_call_operand.vmem [shape: f32[16,32], index: 0, kind: input, shape index: {}]
  %s1 = inlined_call_operand.vmem [shape: f32[16,32], index: 1, kind: input, shape index: {}]
  %s2 = inlined_call_operand.hbm [shape: f32[32,32], index: 2, kind: input, shape index: {}]
  %s3 = inlined_call_operand.vmem [shape: f32[1,32], index: 3, kind: input, shape index: {}]
  %s4 = inlined_call_operand.vmem [shape: f32[2,32,128], index: 4, kind: input, shape index: {}]
  %s5 = inlined_call_operand.hbm [shape: f32[2,32,128], index: 5, kind: input, shape index: {}]
  %s6 = inlined_call_operand.vmem [shape: f32[2,1,128], index: 6, kind: input, shape index: {}]
  %s7 = inlined_call_operand.hbm [shape: f32[32,32], index: 7, kind: input, shape index: {}]
  %s8 = inlined_call_operand.vmem [shape: f32[1,32], index: 8, kind: input, shape index: {}]
  %s9 = inlined_call_operand.vmem [shape: f32[16,32], index: 9, kind: output, shape index: {}]
  %s10 = sld [smem:[#allocation0]]
  $region58: #{torso_forward.1} parent=0
    _
  %s12 = ssub.s32 1, %s10
  %s13 = scalar_select 0, %s12, %s10
  $region1: #{torso_forward.1} parent=0
    #allocation2 [shape = 'u8[16384]{0}', space=vmem, size = 0x4000, scoped, tag = 'input window, operand 2, single buffered']
    #allocation3 [shape = 's32[1]{0}', space=sflag, size = 0x4, scoped, tag = 'scoped memory for torso_forward.1']
    #allocation4 [shape = 'u8[32768]{0}', space=vmem, size = 0x8000, scoped, tag = 'input window, operand 5, single buffered']
    #allocation5 [shape = 's32[1]{0}', space=sflag, size = 0x4, scoped, tag = 'scoped memory for torso_forward.1']
    #allocation6 [shape = 'u8[16384]{0}', space=vmem, size = 0x4000, scoped, tag = 'input window, operand 7, single buffered']
    %14 = vsyncpa [#allocation3], 0
    %15 = vsyncpa [#allocation5], 0
    // Predicated region
    $region2: #{torso_forward.1} parent=1 // pred_check
      _
    $region3: #{torso_forward.1} parent=1 // pred_check_branch
      %17 = sbr.rel (0) target = $region5
    $region4: #{torso_forward.1} parent=1 // pred_region
      _
    $region5: #{torso_forward.1} parent=1 // pred_fallthru
      _
    // Predicated region
    $region6: #{torso_forward.1} parent=1 // pred_check
      _
    $region7: #{torso_forward.1} parent=1 // pred_check_branch
      %19 = sbr.rel (0) target = $region9
    $region8: #{torso_forward.1} parent=1 // pred_region
      _
    $region9: #{torso_forward.1} parent=1 // pred_fallthru
      _
    // Predicated region
    $region10: #{torso_forward.1} parent=1 // pred_check
      _
    $region11: #{torso_forward.1} parent=1 // pred_check_branch
      %21 = sbr.rel (0) target = $region13
    $region12: #{torso_forward.1} parent=1 // pred_region
      %23 = vsyncadd [#allocation3], 0
      %s24 = sshll.u32 %s2, 4
      %s25 = int_to_ptr.hbm [resolvable:$true] %s24
      %s26 = sshll.u32 [#allocation2], 4
      %s27 = int_to_ptr.vmem [resolvable:$true] %s26
      %32 = dma.hbm_to_vmem [thread:$0]  %s25, 512, %s27, [#allocation3], 128, 128, 8
    $region13: #{torso_forward.1} parent=1 // pred_fallthru
      _
    // Predicated region
    $region14: #{torso_forward.1} parent=1 // pred_check
      _
    $region15: #{torso_forward.1} parent=1 // pred_check_branch
      %34 = sbr.rel (0) target = $region17
    $region16: #{torso_forward.1} parent=1 // pred_region
      _
    $region17: #{torso_forward.1} parent=1 // pred_fallthru
      _
    // Predicated region
    $region18: #{torso_forward.1} parent=1 // pred_check
      _
    $region19: #{torso_forward.1} parent=1 // pred_check_branch
      %36 = sbr.rel (0) target = $region21
    $region20: #{torso_forward.1} parent=1 // pred_region
      _
    $region21: #{torso_forward.1} parent=1 // pred_fallthru
      _
    // Predicated region
    $region22: #{torso_forward.1} parent=1 // pred_check
      _
    $region23: #{torso_forward.1} parent=1 // pred_check_branch
      %38 = sbr.rel (0) target = $region25
    $region24: #{torso_forward.1} parent=1 // pred_region
      %40 = vsyncadd [#allocation5], 0
      %s41 = sshll.u32 %s5, 4
      %s42 = int_to_ptr.hbm [resolvable:$true] %s41
      %s43 = sshll.u32 [#allocation4], 4
      %s44 = int_to_ptr.vmem [resolvable:$true] %s43
      %49 = dma.hbm_to_vmem [thread:$0]  %s42, 1024, %s44, [#allocation5], 128, 128, 8
    $region25: #{torso_forward.1} parent=1 // pred_fallthru
      _
    // Predicated region
    $region26: #{torso_forward.1} parent=1 // pred_check
      _
    $region27: #{torso_forward.1} parent=1 // pred_check_branch
      %51 = sbr.rel (0) target = $region29
    $region28: #{torso_forward.1} parent=1 // pred_region
      _
    $region29: #{torso_forward.1} parent=1 // pred_fallthru
      _
    // Predicated region
    $region30: #{torso_forward.1} parent=1 // pred_check
      _
    $region31: #{torso_forward.1} parent=1 // pred_check_branch
      %53 = sbr.rel (0) target = $region33
    $region32: #{torso_forward.1} parent=1 // pred_region
      %55 = vsyncadd [#allocation5], 0
      %s56 = sshll.u32 %s7, 4
      %s57 = int_to_ptr.hbm [resolvable:$true] %s56
      %s58 = sshll.u32 [#allocation6], 4
      %s59 = int_to_ptr.vmem [resolvable:$true] %s58
      %64 = dma.hbm_to_vmem [thread:$0]  %s57, 512, %s59, [#allocation5], 128, 128, 8
    $region33: #{torso_forward.1} parent=1 // pred_fallthru
      _
    // Predicated region
    $region34: #{torso_forward.1} parent=1 // pred_check
      _
    $region35: #{torso_forward.1} parent=1 // pred_check_branch
      %66 = sbr.rel (0) target = $region37
    $region36: #{torso_forward.1} parent=1 // pred_region
      _
    $region37: #{torso_forward.1} parent=1 // pred_fallthru
      _
    // Predicated region
    $region38: #{torso_forward.1} parent=1 // pred_check
      _
    $region39: #{torso_forward.1} parent=1 // pred_check_branch
      %68 = sbr.rel (0) target = $region41
    $region40: #{torso_forward.1} parent=1 // pred_region
      %70 = dma.done [#allocation3], 512
    $region41: #{torso_forward.1} parent=1 // pred_fallthru
      _
    // Predicated region
    $region42: #{torso_forward.1} parent=1 // pred_check
      _
    $region43: #{torso_forward.1} parent=1 // pred_check_branch
      %72 = sbr.rel (0) target = $region45
    $region44: #{torso_forward.1} parent=1 // pred_region
      %74 = dma.done [#allocation5], 1024
    $region45: #{torso_forward.1} parent=1 // pred_fallthru
      _
    // Predicated region
    $region46: #{torso_forward.1} parent=1 // pred_check
      _
    $region47: #{torso_forward.1} parent=1 // pred_check_branch
      %76 = sbr.rel (0) target = $region49
    $region48: #{torso_forward.1} parent=1 // pred_region
      %78 = dma.done [#allocation5], 512
    $region49: #{torso_forward.1} parent=1 // pred_fallthru
      _
    %v79 = vld [vmem:[%s0] sm:$0xff]
    %v80 = vld [vmem:[%s0 + $0x8] sm:$0xff]
    %v81 = vld [vmem:[%s1] sm:$0xff]
    %v82 = vld [vmem:[%s1 + $0x8] sm:$0xff]
    %v83 = vadd.f32 %v79, %v81
    %v84 = vadd.f32 %v80, %v82
    %v85 = vld [vmem:[#allocation2] sm:$0xff]
    %v86 = vld [vmem:[#allocation2 + $0x8] sm:$0xff]
    %v87 = vld [vmem:[#allocation2 + $0x10] sm:$0xff]
    %v88 = vld [vmem:[#allocation2 + $0x18] sm:$0xff]
    %v89 = vld [vmem:[%s3] sm:$0x1]
    %v91 = vperm.slane %v89, 0
    %vm93 = vcmask 261120
    %v95 = vsel %vm93, %v83, 0
    %v98 = vsel %vm93, %v84, 0
    %100 = vmatpush.msra.mxu0 0.0
    %101 = vmatpush.msra.mxu0 0.0
    %102 = vmatpush.msra.mxu0 0.0
    %103 = vmatpush.msra.mxu0 0.0
    %104 = vmatpush.msra.mxu0 0.0
    %105 = vmatpush.msra.mxu0 0.0
    %106 = vmatpush.msra.mxu0 0.0
    %107 = vmatpush.msra.mxu0 0.0
    %108 = vmatpush.msra.mxu0 0.0
    %109 = vmatpush.msra.mxu0 0.0
    %110 = vmatpush.msra.mxu0 0.0
    %111 = vmatpush.msra.mxu0 0.0
    %112 = vmatpush.msra.mxu0 %v88
    %113 = vmatpush.msra.mxu0 %v87
    %114 = vmatpush.msra.mxu0 %v86
    %115 = vmatpush.msra.mxu0 %v85
    %116 = vmatmul.f32.gmra.mxu0 %v95
    %v117 = vpop.f32.mrf.mxu0
    %v118 = vadd.f32 %v91, %v117
    %119 = vmatmul.f32.gmra.mxu0 %v98
    %v120 = vpop.f32.mrf.mxu0
    %v121 = vadd.f32 %v91, %v120
    %122 = vdwg.mxu0
    %v123 = vld [vmem:[%s4] sm:$0xff]
    %v124 = vld [vmem:[%s4 + $0x8] sm:$0xff]
    %v125 = vld [vmem:[%s4 + $0x10] sm:$0xff]
    %v126 = vld [vmem:[%s4 + $0x18] sm:$0xff]
    %v127 = vld [vmem:[%s6] sm:$0x1]
    %v129 = vperm.slane %v127, 0
    %v132 = vsel %vm93, %v118, 0
    %v135 = vsel %vm93, %v121, 0
    %137 = vmatpush.msra.mxu0 0.0
    %138 = vmatpush.msra.mxu0 0.0
    %139 = vmatpush.msra.mxu0 0.0
    %140 = vmatpush.msra.mxu0 0.0
    %141 = vmatpush.msra.mxu0 0.0
    %142 = vmatpush.msra.mxu0 0.0
    %143 = vmatpush.msra.mxu0 0.0
    %144 = vmatpush.msra.mxu0 0.0
    %145 = vmatpush.msra.mxu0 0.0
    %146 = vmatpush.msra.mxu0 0.0
    %147 = vmatpush.msra.mxu0 0.0
    %148 = vmatpush.msra.mxu0 0.0
    %149 = vmatpush.msra.mxu0 %v126
    %150 = vmatpush.msra.mxu0 %v125
    %151 = vmatpush.msra.mxu0 %v124
    %152 = vmatpush.msra.mxu0 %v123
    %153 = vmatmul.f32.gmra.mxu0 %v132
    %v154 = vpop.f32.mrf.mxu0
    %v155 = vadd.f32 %v129, %v154
    %156 = vmatmul.f32.gmra.mxu0 %v135
    %v157 = vpop.f32.mrf.mxu0
    %v158 = vadd.f32 %v129, %v157
    %159 = vdwg.mxu0
    %v160 = vld [vmem:[#allocation4] sm:$0xff]
    %v161 = vld [vmem:[#allocation4 + $0x8] sm:$0xff]
    %v162 = vld [vmem:[#allocation4 + $0x10] sm:$0xff]
    %v163 = vld [vmem:[#allocation4 + $0x18] sm:$0xff]
    %v165 = vsel %vm93, 0.0, 0
    %167 = vmatpush.msra.mxu0 0.0
    %168 = vmatpush.msra.mxu0 0.0
    %169 = vmatpush.msra.mxu0 0.0
    %170 = vmatpush.msra.mxu0 0.0
    %171 = vmatpush.msra.mxu0 0.0
    %172 = vmatpush.msra.mxu0 0.0
    %173 = vmatpush.msra.mxu0 0.0
    %174 = vmatpush.msra.mxu0 0.0
    %175 = vmatpush.msra.mxu0 0.0
    %176 = vmatpush.msra.mxu0 0.0
    %177 = vmatpush.msra.mxu0 0.0
    %178 = vmatpush.msra.mxu0 0.0
    %179 = vmatpush.msra.mxu0 %v163
    %180 = vmatpush.msra.mxu0 %v162
    %181 = vmatpush.msra.mxu0 %v161
    %182 = vmatpush.msra.mxu0 %v160
    %183 = vmatmul.f32.gmra.mxu0 %v165
    %v184 = vpop.f32.mrf.mxu0
    %v185 = vadd.f32 0.0, %v184
    %186 = vdwg.mxu0
    %v187 = vadd.f32 %v155, %v185
    %v188 = vxor.u32 %v187, 2147483648
    %v189 = vmul.f32 %v188, 1.442695
    %v190 = vpow.pop %v189
    %v191 = vadd.f32 %v190, 1.0
    %v192 = vrcp.pop %v191
    %v193 = vmul.f32 %v191, %v192
    %v194 = vsub.f32 1.0, %v193
    %v195 = vmul.f32 %v192, %v194
    %v196 = vadd.f32 %v192, %v195
    %vm197 = vweird.f32 %v191
    %vm198 = vweird.f32 %v192
    %vm199 = vmor %vm197, %vm198
    %v200 = vsel %vm199, %v192, %v196
    %v201 = vand.u32 2147483647, %v191
    %vm202 = vcmp.eq.f32.partialorder %v201, 8.507059e+37
    %v203 = vand.u32 %v191, 2147483648
    %v204 = vor.u32 1.1754944e-38, %v203
    %v205 = vsel %vm202, %v204, %v200
    %v206 = vmul.f32 1.0, %v205
    %v207 = vtanh.pop %v187
    %v208 = vmul.f32 %v206, 0.0
    %210 = vrot.lane.b32.xlu0 %v207, 64
    %v211 = vpop.permute.xlu0 %210
    %v213 = vmul.f32 %v206, %v211
    %215 = vrot.lane.b32.xlu0 %v213, 32
    %v216 = vpop.permute.xlu0 %215
    %v218 = vadd.f32 %v208, %v216
    %v219 = vtanh.pop %v218
    %221 = vrot.lane.b32.xlu0 %v219, 64
    %v222 = vpop.permute.xlu0 %221
    %v224 = vmul.f32 %v206, %v222
    %226 = vrot.lane.b32.xlu0 %v224, 32
    %v227 = vpop.permute.xlu0 %226
    %v228 = vsel %vm93, %v227, 0
    %230 = vmatpush.msra.mxu0 0.0
    %231 = vmatpush.msra.mxu0 0.0
    %232 = vmatpush.msra.mxu0 0.0
    %233 = vmatpush.msra.mxu0 0.0
    %234 = vmatpush.msra.mxu0 0.0
    %235 = vmatpush.msra.mxu0 0.0
    %236 = vmatpush.msra.mxu0 0.0
    %237 = vmatpush.msra.mxu0 0.0
    %238 = vmatpush.msra.mxu0 0.0
    %239 = vmatpush.msra.mxu0 0.0
    %240 = vmatpush.msra.mxu0 0.0
    %241 = vmatpush.msra.mxu0 0.0
    %242 = vmatpush.msra.mxu0 %v163
    %243 = vmatpush.msra.mxu0 %v162
    %244 = vmatpush.msra.mxu0 %v161
    %245 = vmatpush.msra.mxu0 %v160
    %246 = vmatmul.f32.gmra.mxu0 %v228
    %v247 = vpop.f32.mrf.mxu0
    %v248 = vadd.f32 0.0, %v247
    %249 = vdwg.mxu0
    %v251 = vrot.slane %v248, 6
    %v253 = vadd.f32 %v155, %v251
    %v254 = vxor.u32 %v253, 2147483648
    %v255 = vmul.f32 %v254, 1.442695
    %v256 = vpow.pop %v255
    %v257 = vadd.f32 %v256, 1.0
    %v258 = vrcp.pop %v257
    %v259 = vmul.f32 %v257, %v258
    %v260 = vsub.f32 1.0, %v259
    %v261 = vmul.f32 %v258, %v260
    %v262 = vadd.f32 %v258, %v261
    %vm263 = vweird.f32 %v257
    %vm264 = vweird.f32 %v258
    %vm265 = vmor %vm263, %vm264
    %v266 = vsel %vm265, %v258, %v262
    %v267 = vand.u32 2147483647, %v257
    %vm268 = vcmp.eq.f32.partialorder %v267, 8.507059e+37
    %v269 = vand.u32 %v257, 2147483648
    %v270 = vor.u32 1.1754944e-38, %v269
    %v271 = vsel %vm268, %v270, %v266
    %v272 = vmul.f32 1.0, %v271
    %v273 = vtanh.pop %v253
    %v275 = vrot.slane %v218, 6
    %v277 = vmul.f32 %v272, %v275
    %279 = vrot.lane.b32.xlu0 %v273, 64
    %v280 = vpop.permute.xlu0 %279
    %v282 = vmul.f32 %v272, %v280
    %284 = vrot.lane.b32.xlu0 %v282, 32
    %v285 = vpop.permute.xlu0 %284
    %v287 = vadd.f32 %v277, %v285
    %v288 = vtanh.pop %v287
    %290 = vrot.lane.b32.xlu0 %v288, 64
    %v291 = vpop.permute.xlu0 %290
    %v293 = vmul.f32 %v272, %v291
    %v295 = vrot.slane %v293, 2
    %296 = vrot.lane.b32.xlu0 %v295, 32
    %v297 = vpop.permute.xlu0 %296
    %v298 = vsel %vm93, %v297, 0
    %300 = vmatpush.msra.mxu0 0.0
    %301 = vmatpush.msra.mxu0 0.0
    %302 = vmatpush.msra.mxu0 0.0
    %303 = vmatpush.msra.mxu0 0.0
    %304 = vmatpush.msra.mxu0 0.0
    %305 = vmatpush.msra.mxu0 0.0
    %306 = vmatpush.msra.mxu0 0.0
    %307 = vmatpush.msra.mxu0 0.0
    %308 = vmatpush.msra.mxu0 0.0
    %309 = vmatpush.msra.mxu0 0.0
    %310 = vmatpush.msra.mxu0 0.0
    %311 = vmatpush.msra.mxu0 0.0
    %312 = vmatpush.msra.mxu0 %v163
    %313 = vmatpush.msra.mxu0 %v162
    %314 = vmatpush.msra.mxu0 %v161
    %315 = vmatpush.msra.mxu0 %v160
    %316 = vmatmul.f32.gmra.mxu0 %v298
    %v317 = vpop.f32.mrf.mxu0
    %v318 = vadd.f32 0.0, %v317
    %319 = vdwg.mxu0
    %v321 = vrot.slane %v318, 4
    %v323 = vadd.f32 %v155, %v321
    %v324 = vxor.u32 %v323, 2147483648
    %v325 = vmul.f32 %v324, 1.442695
    %v326 = vpow.pop %v325
    %v327 = vadd.f32 %v326, 1.0
    %v328 = vrcp.pop %v327
    %v329 = vmul.f32 %v327, %v328
    %v330 = vsub.f32 1.0, %v329
    %v331 = vmul.f32 %v328, %v330
    %v332 = vadd.f32 %v328, %v331
    %vm333 = vweird.f32 %v327
    %vm334 = vweird.f32 %v328
    %vm335 = vmor %vm333, %vm334
    %v336 = vsel %vm335, %v328, %v332
    %v337 = vand.u32 2147483647, %v327
    %vm338 = vcmp.eq.f32.partialorder %v337, 8.507059e+37
    %v339 = vand.u32 %v327, 2147483648
    %v340 = vor.u32 1.1754944e-38, %v339
    %v341 = vsel %vm338, %v340, %v336
    %v342 = vmul.f32 1.0, %v341
    %v343 = vtanh.pop %v323
    %v345 = vrot.slane %v287, 6
    %v347 = vmul.f32 %v342, %v345
    %349 = vrot.lane.b32.xlu0 %v343, 64
    %v350 = vpop.permute.xlu0 %349
    %v352 = vmul.f32 %v342, %v350
    %354 = vrot.lane.b32.xlu0 %v352, 32
    %v355 = vpop.permute.xlu0 %354
    %v357 = vadd.f32 %v347, %v355
    %v358 = vtanh.pop %v357
    %360 = vrot.lane.b32.xlu0 %v358, 64
    %v361 = vpop.permute.xlu0 %360
    %v363 = vmul.f32 %v342, %v361
    %v365 = vrot.slane %v363, 4
    %366 = vrot.lane.b32.xlu0 %v365, 32
    %v367 = vpop.permute.xlu0 %366
    %v368 = vsel %vm93, %v367, 0
    %370 = vmatpush.msra.mxu0 0.0
    %371 = vmatpush.msra.mxu0 0.0
    %372 = vmatpush.msra.mxu0 0.0
    %373 = vmatpush.msra.mxu0 0.0
    %374 = vmatpush.msra.mxu0 0.0
    %375 = vmatpush.msra.mxu0 0.0
    %376 = vmatpush.msra.mxu0 0.0
    %377 = vmatpush.msra.mxu0 0.0
    %378 = vmatpush.msra.mxu0 0.0
    %379 = vmatpush.msra.mxu0 0.0
    %380 = vmatpush.msra.mxu0 0.0
    %381 = vmatpush.msra.mxu0 0.0
    %382 = vmatpush.msra.mxu0 %v163
    %383 = vmatpush.msra.mxu0 %v162
    %384 = vmatpush.msra.mxu0 %v161
    %385 = vmatpush.msra.mxu0 %v160
    %386 = vmatmul.f32.gmra.mxu0 %v368
    %v387 = vpop.f32.mrf.mxu0
    %v388 = vadd.f32 0.0, %v387
    %389 = vdwg.mxu0
    %v391 = vrot.slane %v388, 2
    %v393 = vadd.f32 %v155, %v391
    %v394 = vxor.u32 %v393, 2147483648
    %v395 = vmul.f32 %v394, 1.442695
    %v396 = vpow.pop %v395
    %v397 = vadd.f32 %v396, 1.0
    %v398 = vrcp.pop %v397
    %v399 = vmul.f32 %v397, %v398
    %v400 = vsub.f32 1.0, %v399
    %v401 = vmul.f32 %v398, %v400
    %v402 = vadd.f32 %v398, %v401
    %vm403 = vweird.f32 %v397
    %vm404 = vweird.f32 %v398
    %vm405 = vmor %vm403, %vm404
    %v406 = vsel %vm405, %v398, %v402
    %v407 = vand.u32 2147483647, %v397
    %vm408 = vcmp.eq.f32.partialorder %v407, 8.507059e+37
    %v409 = vand.u32 %v397, 2147483648
    %v410 = vor.u32 1.1754944e-38, %v409
    %v411 = vsel %vm408, %v410, %v406
    %v412 = vmul.f32 1.0, %v411
    %v413 = vtanh.pop %v393
    %v415 = vrot.slane %v357, 6
    %v417 = vmul.f32 %v412, %v415
    %419 = vrot.lane.b32.xlu0 %v413, 64
    %v420 = vpop.permute.xlu0 %419
    %v422 = vmul.f32 %v412, %v420
    %424 = vrot.lane.b32.xlu0 %v422, 32
    %v425 = vpop.permute.xlu0 %424
    %v427 = vadd.f32 %v417, %v425
    %v428 = vtanh.pop %v427
    %430 = vrot.lane.b32.xlu0 %v428, 64
    %v431 = vpop.permute.xlu0 %430
    %v433 = vmul.f32 %v412, %v431
    %v435 = vrot.slane %v433, 6
    %436 = vrot.lane.b32.xlu0 %v435, 32
    %v437 = vpop.permute.xlu0 %436
    %v438 = vsel %vm93, %v437, 0
    %440 = vmatpush.msra.mxu0 0.0
    %441 = vmatpush.msra.mxu0 0.0
    %442 = vmatpush.msra.mxu0 0.0
    %443 = vmatpush.msra.mxu0 0.0
    %444 = vmatpush.msra.mxu0 0.0
    %445 = vmatpush.msra.mxu0 0.0
    %446 = vmatpush.msra.mxu0 0.0
    %447 = vmatpush.msra.mxu0 0.0
    %448 = vmatpush.msra.mxu0 0.0
    %449 = vmatpush.msra.mxu0 0.0
    %450 = vmatpush.msra.mxu0 0.0
    %451 = vmatpush.msra.mxu0 0.0
    %452 = vmatpush.msra.mxu0 %v163
    %453 = vmatpush.msra.mxu0 %v162
    %454 = vmatpush.msra.mxu0 %v161
    %455 = vmatpush.msra.mxu0 %v160
    %456 = vmatmul.f32.gmra.mxu0 %v438
    %v457 = vpop.f32.mrf.mxu0
    %v458 = vadd.f32 0.0, %v457
    %459 = vdwg.mxu0
    %v460 = vadd.f32 %v158, %v458
    %v461 = vxor.u32 %v460, 2147483648
    %v462 = vmul.f32 %v461, 1.442695
    %v463 = vpow.pop %v462
    %v464 = vadd.f32 %v463, 1.0
    %v465 = vrcp.pop %v464
    %v466 = vmul.f32 %v464, %v465
    %v467 = vsub.f32 1.0, %v466
    %v468 = vmul.f32 %v465, %v467
    %v469 = vadd.f32 %v465, %v468
    %vm470 = vweird.f32 %v464
    %vm471 = vweird.f32 %v465
    %vm472 = vmor %vm470, %vm471
    %v473 = vsel %vm472, %v465, %v469
    %v474 = vand.u32 2147483647, %v464
    %vm475 = vcmp.eq.f32.partialorder %v474, 8.507059e+37
    %v476 = vand.u32 %v464, 2147483648
    %v477 = vor.u32 1.1754944e-38, %v476
    %v478 = vsel %vm475, %v477, %v473
    %v479 = vmul.f32 1.0, %v478
    %v480 = vtanh.pop %v460
    %v482 = vrot.slane %v427, 6
    %v484 = vmul.f32 %v479, %v482
    %486 = vrot.lane.b32.xlu0 %v480, 64
    %v487 = vpop.permute.xlu0 %486
    %v489 = vmul.f32 %v479, %v487
    %491 = vrot.lane.b32.xlu0 %v489, 32
    %v492 = vpop.permute.xlu0 %491
    %v494 = vadd.f32 %v484, %v492
    %v495 = vtanh.pop %v494
    %497 = vrot.lane.b32.xlu0 %v495, 64
    %v498 = vpop.permute.xlu0 %497
    %v500 = vmul.f32 %v479, %v498
    %502 = vrot.lane.b32.xlu0 %v500, 32
    %v503 = vpop.permute.xlu0 %502
    %v504 = vsel %vm93, %v503, 0
    %506 = vmatpush.msra.mxu0 0.0
    %507 = vmatpush.msra.mxu0 0.0
    %508 = vmatpush.msra.mxu0 0.0
    %509 = vmatpush.msra.mxu0 0.0
    %510 = vmatpush.msra.mxu0 0.0
    %511 = vmatpush.msra.mxu0 0.0
    %512 = vmatpush.msra.mxu0 0.0
    %513 = vmatpush.msra.mxu0 0.0
    %514 = vmatpush.msra.mxu0 0.0
    %515 = vmatpush.msra.mxu0 0.0
    %516 = vmatpush.msra.mxu0 0.0
    %517 = vmatpush.msra.mxu0 0.0
    %518 = vmatpush.msra.mxu0 %v163
    %519 = vmatpush.msra.mxu0 %v162
    %520 = vmatpush.msra.mxu0 %v161
    %521 = vmatpush.msra.mxu0 %v160
    %522 = vmatmul.f32.gmra.mxu0 %v504
    %v523 = vpop.f32.mrf.mxu0
    %v524 = vadd.f32 0.0, %v523
    %525 = vdwg.mxu0
    %v527 = vrot.slane %v524, 6
    %v529 = vadd.f32 %v158, %v527
    %v530 = vxor.u32 %v529, 2147483648
    %v531 = vmul.f32 %v530, 1.442695
    %v532 = vpow.pop %v531
    %v533 = vadd.f32 %v532, 1.0
    %v534 = vrcp.pop %v533
    %v535 = vmul.f32 %v533, %v534
    %v536 = vsub.f32 1.0, %v535
    %v537 = vmul.f32 %v534, %v536
    %v538 = vadd.f32 %v534, %v537
    %vm539 = vweird.f32 %v533
    %vm540 = vweird.f32 %v534
    %vm541 = vmor %vm539, %vm540
    %v542 = vsel %vm541, %v534, %v538
    %v543 = vand.u32 2147483647, %v533
    %vm544 = vcmp.eq.f32.partialorder %v543, 8.507059e+37
    %v545 = vand.u32 %v533, 2147483648
    %v546 = vor.u32 1.1754944e-38, %v545
    %v547 = vsel %vm544, %v546, %v542
    %v548 = vmul.f32 1.0, %v547
    %v549 = vtanh.pop %v529
    %v551 = vrot.slane %v494, 6
    %v553 = vmul.f32 %v548, %v551
    %555 = vrot.lane.b32.xlu0 %v549, 64
    %v556 = vpop.permute.xlu0 %555
    %v558 = vmul.f32 %v548, %v556
    %560 = vrot.lane.b32.xlu0 %v558, 32
    %v561 = vpop.permute.xlu0 %560
    %v563 = vadd.f32 %v553, %v561
    %v564 = vtanh.pop %v563
    %566 = vrot.lane.b32.xlu0 %v564, 64
    %v567 = vpop.permute.xlu0 %566
    %v569 = vmul.f32 %v548, %v567
    %v571 = vrot.slane %v569, 2
    %572 = vrot.lane.b32.xlu0 %v571, 32
    %v573 = vpop.permute.xlu0 %572
    %v574 = vsel %vm93, %v573, 0
    %576 = vmatpush.msra.mxu0 0.0
    %577 = vmatpush.msra.mxu0 0.0
    %578 = vmatpush.msra.mxu0 0.0
    %579 = vmatpush.msra.mxu0 0.0
    %580 = vmatpush.msra.mxu0 0.0
    %581 = vmatpush.msra.mxu0 0.0
    %582 = vmatpush.msra.mxu0 0.0
    %583 = vmatpush.msra.mxu0 0.0
    %584 = vmatpush.msra.mxu0 0.0
    %585 = vmatpush.msra.mxu0 0.0
    %586 = vmatpush.msra.mxu0 0.0
    %587 = vmatpush.msra.mxu0 0.0
    %588 = vmatpush.msra.mxu0 %v163
    %589 = vmatpush.msra.mxu0 %v162
    %590 = vmatpush.msra.mxu0 %v161
    %591 = vmatpush.msra.mxu0 %v160
    %592 = vmatmul.f32.gmra.mxu0 %v574
    %v593 = vpop.f32.mrf.mxu0
    %v594 = vadd.f32 0.0, %v593
    %595 = vdwg.mxu0
    %v597 = vrot.slane %v594, 4
    %v599 = vadd.f32 %v158, %v597
    %v600 = vxor.u32 %v599, 2147483648
    %v601 = vmul.f32 %v600, 1.442695
    %v602 = vpow.pop %v601
    %v603 = vadd.f32 %v602, 1.0
    %v604 = vrcp.pop %v603
    %v605 = vmul.f32 %v603, %v604
    %v606 = vsub.f32 1.0, %v605
    %v607 = vmul.f32 %v604, %v606
    %v608 = vadd.f32 %v604, %v607
    %vm609 = vweird.f32 %v603
    %vm610 = vweird.f32 %v604
    %vm611 = vmor %vm609, %vm610
    %v612 = vsel %vm611, %v604, %v608
    %v613 = vand.u32 2147483647, %v603
    %vm614 = vcmp.eq.f32.partialorder %v613, 8.507059e+37
    %v615 = vand.u32 %v603, 2147483648
    %v616 = vor.u32 1.1754944e-38, %v615
    %v617 = vsel %vm614, %v616, %v612
    %v618 = vmul.f32 1.0, %v617
    %v619 = vtanh.pop %v599
    %v621 = vrot.slane %v563, 6
    %v623 = vmul.f32 %v618, %v621
    %625 = vrot.lane.b32.xlu0 %v619, 64
    %v626 = vpop.permute.xlu0 %625
    %v628 = vmul.f32 %v618, %v626
    %630 = vrot.lane.b32.xlu0 %v628, 32
    %v631 = vpop.permute.xlu0 %630
    %v633 = vadd.f32 %v623, %v631
    %v634 = vtanh.pop %v633
    %636 = vrot.lane.b32.xlu0 %v634, 64
    %v637 = vpop.permute.xlu0 %636
    %v639 = vmul.f32 %v618, %v637
    %v641 = vrot.slane %v639, 4
    %642 = vrot.lane.b32.xlu0 %v641, 32
    %v643 = vpop.permute.xlu0 %642
    %v644 = vsel %vm93, %v643, 0
    %646 = vmatpush.msra.mxu0 0.0
    %647 = vmatpush.msra.mxu0 0.0
    %648 = vmatpush.msra.mxu0 0.0
    %649 = vmatpush.msra.mxu0 0.0
    %650 = vmatpush.msra.mxu0 0.0
    %651 = vmatpush.msra.mxu0 0.0
    %652 = vmatpush.msra.mxu0 0.0
    %653 = vmatpush.msra.mxu0 0.0
    %654 = vmatpush.msra.mxu0 0.0
    %655 = vmatpush.msra.mxu0 0.0
    %656 = vmatpush.msra.mxu0 0.0
    %657 = vmatpush.msra.mxu0 0.0
    %658 = vmatpush.msra.mxu0 %v163
    %659 = vmatpush.msra.mxu0 %v162
    %660 = vmatpush.msra.mxu0 %v161
    %661 = vmatpush.msra.mxu0 %v160
    %662 = vmatmul.f32.gmra.mxu0 %v644
    %v663 = vpop.f32.mrf.mxu0
    %v664 = vadd.f32 0.0, %v663
    %665 = vdwg.mxu0
    %v667 = vrot.slane %v664, 2
    %v669 = vadd.f32 %v158, %v667
    %v670 = vxor.u32 %v669, 2147483648
    %v671 = vmul.f32 %v670, 1.442695
    %v672 = vpow.pop %v671
    %v673 = vadd.f32 %v672, 1.0
    %v674 = vrcp.pop %v673
    %v675 = vmul.f32 %v673, %v674
    %v676 = vsub.f32 1.0, %v675
    %v677 = vmul.f32 %v674, %v676
    %v678 = vadd.f32 %v674, %v677
    %vm679 = vweird.f32 %v673
    %vm680 = vweird.f32 %v674
    %vm681 = vmor %vm679, %vm680
    %v682 = vsel %vm681, %v674, %v678
    %v683 = vand.u32 2147483647, %v673
    %vm684 = vcmp.eq.f32.partialorder %v683, 8.507059e+37
    %v685 = vand.u32 %v673, 2147483648
    %v686 = vor.u32 1.1754944e-38, %v685
    %v687 = vsel %vm684, %v686, %v682
    %v688 = vmul.f32 1.0, %v687
    %v689 = vtanh.pop %v669
    %v691 = vrot.slane %v633, 6
    %v693 = vmul.f32 %v688, %v691
    %695 = vrot.lane.b32.xlu0 %v689, 64
    %v696 = vpop.permute.xlu0 %695
    %v698 = vmul.f32 %v688, %v696
    %700 = vrot.lane.b32.xlu0 %v698, 32
    %v701 = vpop.permute.xlu0 %700
    %v703 = vadd.f32 %v693, %v701
    %v704 = vtanh.pop %v703
    %706 = vrot.lane.b32.xlu0 %v704, 64
    %v707 = vpop.permute.xlu0 %706
    %v709 = vmul.f32 %v688, %v707
    %vm710 = vcmask 1041408
    %v711 = vsel %vm710, %v224, %v293
    %vm712 = vcmask 1043456
    %v713 = vsel %vm712, %v711, %v363
    %vm714 = vcmask 1045504
    %v715 = vsel %vm714, %v713, %v433
    %v716 = vsel %vm710, %v500, %v569
    %v717 = vsel %vm712, %v716, %v639
    %v718 = vsel %vm714, %v717, %v709
    %s719 = scalar_lea.vmem %s4, 32
    %v720 = vld [vmem:[%s719] sm:$0xff]
    %v721 = vld [vmem:[%s719 + $0x8] sm:$0xff]
    %v722 = vld [vmem:[%s719 + $0x10] sm:$0xff]
    %v723 = vld [vmem:[%s719 + $0x18] sm:$0xff]
    %s724 = scalar_lea.vmem %s6, 1
    %v725 = vld [vmem:[%s724] sm:$0x1]
    %v727 = vperm.slane %v725, 0
    %731 = vrot.lane.b32.xlu0 %v715, 32
    %v732 = vpop.permute.xlu0 %731
    %733 = vrot.lane.b32.xlu0 %v718, 32
    %v734 = vpop.permute.xlu0 %733
    %v735 = vsel %vm93, %v732, 0
    %v737 = vsel %vm93, %v734, 0
    %739 = vmatpush.msra.mxu0 0.0
    %740 = vmatpush.msra.mxu0 0.0
    %741 = vmatpush.msra.mxu0 0.0
    %742 = vmatpush.msra.mxu0 0.0
    %743 = vmatpush.msra.mxu0 0.0
    %744 = vmatpush.msra.mxu0 0.0
    %745 = vmatpush.msra.mxu0 0.0
    %746 = vmatpush.msra.mxu0 0.0
    %747 = vmatpush.msra.mxu0 0.0
    %748 = vmatpush.msra.mxu0 0.0
    %749 = vmatpush.msra.mxu0 0.0
    %750 = vmatpush.msra.mxu0 0.0
    %751 = vmatpush.msra.mxu0 %v723
    %752 = vmatpush.msra.mxu0 %v722
    %753 = vmatpush.msra.mxu0 %v721
    %754 = vmatpush.msra.mxu0 %v720
    %755 = vmatmul.f32.gmra.mxu0 %v735
    %v756 = vpop.f32.mrf.mxu0
    %v757 = vadd.f32 %v727, %v756
    %758 = vmatmul.f32.gmra.mxu0 %v737
    %v759 = vpop.f32.mrf.mxu0
    %v760 = vadd.f32 %v727, %v759
    %761 = vdwg.mxu0
    %s762 = scalar_lea.vmem [#allocation4], 32
    %v763 = vld [vmem:[%s762] sm:$0xff]
    %v764 = vld [vmem:[%s762 + $0x8] sm:$0xff]
    %v765 = vld [vmem:[%s762 + $0x10] sm:$0xff]
    %v766 = vld [vmem:[%s762 + $0x18] sm:$0xff]
    %767 = vmatpush.msra.mxu0 0.0
    %768 = vmatpush.msra.mxu0 0.0
    %769 = vmatpush.msra.mxu0 0.0
    %770 = vmatpush.msra.mxu0 0.0
    %771 = vmatpush.msra.mxu0 0.0
    %772 = vmatpush.msra.mxu0 0.0
    %773 = vmatpush.msra.mxu0 0.0
    %774 = vmatpush.msra.mxu0 0.0
    %775 = vmatpush.msra.mxu0 0.0
    %776 = vmatpush.msra.mxu0 0.0
    %777 = vmatpush.msra.mxu0 0.0
    %778 = vmatpush.msra.mxu0 0.0
    %779 = vmatpush.msra.mxu0 %v766
    %780 = vmatpush.msra.mxu0 %v765
    %781 = vmatpush.msra.mxu0 %v764
    %782 = vmatpush.msra.mxu0 %v763
    %783 = vmatmul.f32.gmra.mxu0 %v165
    %v784 = vpop.f32.mrf.mxu0
    %v785 = vadd.f32 0.0, %v784
    %786 = vdwg.mxu0
    %v787 = vadd.f32 %v757, %v785
    %v788 = vxor.u32 %v787, 2147483648
    %v789 = vmul.f32 %v788, 1.442695
    %v790 = vpow.pop %v789
    %v791 = vadd.f32 %v790, 1.0
    %v792 = vrcp.pop %v791
    %v793 = vmul.f32 %v791, %v792
    %v794 = vsub.f32 1.0, %v793
    %v795 = vmul.f32 %v792, %v794
    %v796 = vadd.f32 %v792, %v795
    %vm797 = vweird.f32 %v791
    %vm798 = vweird.f32 %v792
    %vm799 = vmor %vm797, %vm798
    %v800 = vsel %vm799, %v792, %v796
    %v801 = vand.u32 2147483647, %v791
    %vm802 = vcmp.eq.f32.partialorder %v801, 8.507059e+37
    %v803 = vand.u32 %v791, 2147483648
    %v804 = vor.u32 1.1754944e-38, %v803
    %v805 = vsel %vm802, %v804, %v800
    %v806 = vmul.f32 1.0, %v805
    %v807 = vtanh.pop %v787
    %v808 = vmul.f32 %v806, 0.0
    %810 = vrot.lane.b32.xlu0 %v807, 64
    %v811 = vpop.permute.xlu0 %810
    %v813 = vmul.f32 %v806, %v811
    %815 = vrot.lane.b32.xlu0 %v813, 32
    %v816 = vpop.permute.xlu0 %815
    %v818 = vadd.f32 %v808, %v816
    %v819 = vtanh.pop %v818
    %821 = vrot.lane.b32.xlu0 %v819, 64
    %v822 = vpop.permute.xlu0 %821
    %v824 = vmul.f32 %v806, %v822
    %826 = vrot.lane.b32.xlu0 %v824, 32
    %v827 = vpop.permute.xlu0 %826
    %v828 = vsel %vm93, %v827, 0
    %830 = vmatpush.msra.mxu0 0.0
    %831 = vmatpush.msra.mxu0 0.0
    %832 = vmatpush.msra.mxu0 0.0
    %833 = vmatpush.msra.mxu0 0.0
    %834 = vmatpush.msra.mxu0 0.0
    %835 = vmatpush.msra.mxu0 0.0
    %836 = vmatpush.msra.mxu0 0.0
    %837 = vmatpush.msra.mxu0 0.0
    %838 = vmatpush.msra.mxu0 0.0
    %839 = vmatpush.msra.mxu0 0.0
    %840 = vmatpush.msra.mxu0 0.0
    %841 = vmatpush.msra.mxu0 0.0
    %842 = vmatpush.msra.mxu0 %v766
    %843 = vmatpush.msra.mxu0 %v765
    %844 = vmatpush.msra.mxu0 %v764
    %845 = vmatpush.msra.mxu0 %v763
    %846 = vmatmul.f32.gmra.mxu0 %v828
    %v847 = vpop.f32.mrf.mxu0
    %v848 = vadd.f32 0.0, %v847
    %849 = vdwg.mxu0
    %v851 = vrot.slane %v848, 6
    %v853 = vadd.f32 %v757, %v851
    %v854 = vxor.u32 %v853, 2147483648
    %v855 = vmul.f32 %v854, 1.442695
    %v856 = vpow.pop %v855
    %v857 = vadd.f32 %v856, 1.0
    %v858 = vrcp.pop %v857
    %v859 = vmul.f32 %v857, %v858
    %v860 = vsub.f32 1.0, %v859
    %v861 = vmul.f32 %v858, %v860
    %v862 = vadd.f32 %v858, %v861
    %vm863 = vweird.f32 %v857
    %vm864 = vweird.f32 %v858
    %vm865 = vmor %vm863, %vm864
    %v866 = vsel %vm865, %v858, %v862
    %v867 = vand.u32 2147483647, %v857
    %vm868 = vcmp.eq.f32.partialorder %v867, 8.507059e+37
    %v869 = vand.u32 %v857, 2147483648
    %v870 = vor.u32 1.1754944e-38, %v869
    %v871 = vsel %vm868, %v870, %v866
    %v872 = vmul.f32 1.0, %v871
    %v873 = vtanh.pop %v853
    %v875 = vrot.slane %v818, 6
    %v877 = vmul.f32 %v872, %v875
    %879 = vrot.lane.b32.xlu0 %v873, 64
    %v880 = vpop.permute.xlu0 %879
    %v882 = vmul.f32 %v872, %v880
    %884 = vrot.lane.b32.xlu0 %v882, 32
    %v885 = vpop.permute.xlu0 %884
    %v887 = vadd.f32 %v877, %v885
    %v888 = vtanh.pop %v887
    %890 = vrot.lane.b32.xlu0 %v888, 64
    %v891 = vpop.permute.xlu0 %890
    %v893 = vmul.f32 %v872, %v891
    %v895 = vrot.slane %v893, 2
    %896 = vrot.lane.b32.xlu0 %v895, 32
    %v897 = vpop.permute.xlu0 %896
    %v898 = vsel %vm93, %v897, 0
    %900 = vmatpush.msra.mxu0 0.0
    %901 = vmatpush.msra.mxu0 0.0
    %902 = vmatpush.msra.mxu0 0.0
    %903 = vmatpush.msra.mxu0 0.0
    %904 = vmatpush.msra.mxu0 0.0
    %905 = vmatpush.msra.mxu0 0.0
    %906 = vmatpush.msra.mxu0 0.0
    %907 = vmatpush.msra.mxu0 0.0
    %908 = vmatpush.msra.mxu0 0.0
    %909 = vmatpush.msra.mxu0 0.0
    %910 = vmatpush.msra.mxu0 0.0
    %911 = vmatpush.msra.mxu0 0.0
    %912 = vmatpush.msra.mxu0 %v766
    %913 = vmatpush.msra.mxu0 %v765
    %914 = vmatpush.msra.mxu0 %v764
    %915 = vmatpush.msra.mxu0 %v763
    %916 = vmatmul.f32.gmra.mxu0 %v898
    %v917 = vpop.f32.mrf.mxu0
    %v918 = vadd.f32 0.0, %v917
    %919 = vdwg.mxu0
    %v921 = vrot.slane %v918, 4
    %v923 = vadd.f32 %v757, %v921
    %v924 = vxor.u32 %v923, 2147483648
    %v925 = vmul.f32 %v924, 1.442695
    %v926 = vpow.pop %v925
    %v927 = vadd.f32 %v926, 1.0
    %v928 = vrcp.pop %v927
    %v929 = vmul.f32 %v927, %v928
    %v930 = vsub.f32 1.0, %v929
    %v931 = vmul.f32 %v928, %v930
    %v932 = vadd.f32 %v928, %v931
    %vm933 = vweird.f32 %v927
    %vm934 = vweird.f32 %v928
    %vm935 = vmor %vm933, %vm934
    %v936 = vsel %vm935, %v928, %v932
    %v937 = vand.u32 2147483647, %v927
    %vm938 = vcmp.eq.f32.partialorder %v937, 8.507059e+37
    %v939 = vand.u32 %v927, 2147483648
    %v940 = vor.u32 1.1754944e-38, %v939
    %v941 = vsel %vm938, %v940, %v936
    %v942 = vmul.f32 1.0, %v941
    %v943 = vtanh.pop %v923
    %v945 = vrot.slane %v887, 6
    %v947 = vmul.f32 %v942, %v945
    %949 = vrot.lane.b32.xlu0 %v943, 64
    %v950 = vpop.permute.xlu0 %949
    %v952 = vmul.f32 %v942, %v950
    %954 = vrot.lane.b32.xlu0 %v952, 32
    %v955 = vpop.permute.xlu0 %954
    %v957 = vadd.f32 %v947, %v955
    %v958 = vtanh.pop %v957
    %960 = vrot.lane.b32.xlu0 %v958, 64
    %v961 = vpop.permute.xlu0 %960
    %v963 = vmul.f32 %v942, %v961
    %v965 = vrot.slane %v963, 4
    %966 = vrot.lane.b32.xlu0 %v965, 32
    %v967 = vpop.permute.xlu0 %966
    %v968 = vsel %vm93, %v967, 0
    %970 = vmatpush.msra.mxu0 0.0
    %971 = vmatpush.msra.mxu0 0.0
    %972 = vmatpush.msra.mxu0 0.0
    %973 = vmatpush.msra.mxu0 0.0
    %974 = vmatpush.msra.mxu0 0.0
    %975 = vmatpush.msra.mxu0 0.0
    %976 = vmatpush.msra.mxu0 0.0
    %977 = vmatpush.msra.mxu0 0.0
    %978 = vmatpush.msra.mxu0 0.0
    %979 = vmatpush.msra.mxu0 0.0
    %980 = vmatpush.msra.mxu0 0.0
    %981 = vmatpush.msra.mxu0 0.0
    %982 = vmatpush.msra.mxu0 %v766
    %983 = vmatpush.msra.mxu0 %v765
    %984 = vmatpush.msra.mxu0 %v764
    %985 = vmatpush.msra.mxu0 %v763
    %986 = vmatmul.f32.gmra.mxu0 %v968
    %v987 = vpop.f32.mrf.mxu0
    %v988 = vadd.f32 0.0, %v987
    %989 = vdwg.mxu0
    %v991 = vrot.slane %v988, 2
    %v993 = vadd.f32 %v757, %v991
    %v994 = vxor.u32 %v993, 2147483648
    %v995 = vmul.f32 %v994, 1.442695
    %v996 = vpow.pop %v995
    %v997 = vadd.f32 %v996, 1.0
    %v998 = vrcp.pop %v997
    %v999 = vmul.f32 %v997, %v998
    %v1000 = vsub.f32 1.0, %v999
    %v1001 = vmul.f32 %v998, %v1000
    %v1002 = vadd.f32 %v998, %v1001
    %vm1003 = vweird.f32 %v997
    %vm1004 = vweird.f32 %v998
    %vm1005 = vmor %vm1003, %vm1004
    %v1006 = vsel %vm1005, %v998, %v1002
    %v1007 = vand.u32 2147483647, %v997
    %vm1008 = vcmp.eq.f32.partialorder %v1007, 8.507059e+37
    %v1009 = vand.u32 %v997, 2147483648
    %v1010 = vor.u32 1.1754944e-38, %v1009
    %v1011 = vsel %vm1008, %v1010, %v1006
    %v1012 = vmul.f32 1.0, %v1011
    %v1013 = vtanh.pop %v993
    %v1015 = vrot.slane %v957, 6
    %v1017 = vmul.f32 %v1012, %v1015
    %1019 = vrot.lane.b32.xlu0 %v1013, 64
    %v1020 = vpop.permute.xlu0 %1019
    %v1022 = vmul.f32 %v1012, %v1020
    %1024 = vrot.lane.b32.xlu0 %v1022, 32
    %v1025 = vpop.permute.xlu0 %1024
    %v1027 = vadd.f32 %v1017, %v1025
    %v1028 = vtanh.pop %v1027
    %1030 = vrot.lane.b32.xlu0 %v1028, 64
    %v1031 = vpop.permute.xlu0 %1030
    %v1033 = vmul.f32 %v1012, %v1031
    %v1035 = vrot.slane %v1033, 6
    %1036 = vrot.lane.b32.xlu0 %v1035, 32
    %v1037 = vpop.permute.xlu0 %1036
    %v1038 = vsel %vm93, %v1037, 0
    %1040 = vmatpush.msra.mxu0 0.0
    %1041 = vmatpush.msra.mxu0 0.0
    %1042 = vmatpush.msra.mxu0 0.0
    %1043 = vmatpush.msra.mxu0 0.0
    %1044 = vmatpush.msra.mxu0 0.0
    %1045 = vmatpush.msra.mxu0 0.0
    %1046 = vmatpush.msra.mxu0 0.0
    %1047 = vmatpush.msra.mxu0 0.0
    %1048 = vmatpush.msra.mxu0 0.0
    %1049 = vmatpush.msra.mxu0 0.0
    %1050 = vmatpush.msra.mxu0 0.0
    %1051 = vmatpush.msra.mxu0 0.0
    %1052 = vmatpush.msra.mxu0 %v766
    %1053 = vmatpush.msra.mxu0 %v765
    %1054 = vmatpush.msra.mxu0 %v764
    %1055 = vmatpush.msra.mxu0 %v763
    %1056 = vmatmul.f32.gmra.mxu0 %v1038
    %v1057 = vpop.f32.mrf.mxu0
    %v1058 = vadd.f32 0.0, %v1057
    %1059 = vdwg.mxu0
    %v1060 = vadd.f32 %v760, %v1058
    %v1061 = vxor.u32 %v1060, 2147483648
    %v1062 = vmul.f32 %v1061, 1.442695
    %v1063 = vpow.pop %v1062
    %v1064 = vadd.f32 %v1063, 1.0
    %v1065 = vrcp.pop %v1064
    %v1066 = vmul.f32 %v1064, %v1065
    %v1067 = vsub.f32 1.0, %v1066
    %v1068 = vmul.f32 %v1065, %v1067
    %v1069 = vadd.f32 %v1065, %v1068
    %vm1070 = vweird.f32 %v1064
    %vm1071 = vweird.f32 %v1065
    %vm1072 = vmor %vm1070, %vm1071
    %v1073 = vsel %vm1072, %v1065, %v1069
    %v1074 = vand.u32 2147483647, %v1064
    %vm1075 = vcmp.eq.f32.partialorder %v1074, 8.507059e+37
    %v1076 = vand.u32 %v1064, 2147483648
    %v1077 = vor.u32 1.1754944e-38, %v1076
    %v1078 = vsel %vm1075, %v1077, %v1073
    %v1079 = vmul.f32 1.0, %v1078
    %v1080 = vtanh.pop %v1060
    %v1082 = vrot.slane %v1027, 6
    %v1084 = vmul.f32 %v1079, %v1082
    %1086 = vrot.lane.b32.xlu0 %v1080, 64
    %v1087 = vpop.permute.xlu0 %1086
    %v1089 = vmul.f32 %v1079, %v1087
    %1091 = vrot.lane.b32.xlu0 %v1089, 32
    %v1092 = vpop.permute.xlu0 %1091
    %v1094 = vadd.f32 %v1084, %v1092
    %v1095 = vtanh.pop %v1094
    %1097 = vrot.lane.b32.xlu0 %v1095, 64
    %v1098 = vpop.permute.xlu0 %1097
    %v1100 = vmul.f32 %v1079, %v1098
    %1102 = vrot.lane.b32.xlu0 %v1100, 32
    %v1103 = vpop.permute.xlu0 %1102
    %v1104 = vsel %vm93, %v1103, 0
    %1106 = vmatpush.msra.mxu0 0.0
    %1107 = vmatpush.msra.mxu0 0.0
    %1108 = vmatpush.msra.mxu0 0.0
    %1109 = vmatpush.msra.mxu0 0.0
    %1110 = vmatpush.msra.mxu0 0.0
    %1111 = vmatpush.msra.mxu0 0.0
    %1112 = vmatpush.msra.mxu0 0.0
    %1113 = vmatpush.msra.mxu0 0.0
    %1114 = vmatpush.msra.mxu0 0.0
    %1115 = vmatpush.msra.mxu0 0.0
    %1116 = vmatpush.msra.mxu0 0.0
    %1117 = vmatpush.msra.mxu0 0.0
    %1118 = vmatpush.msra.mxu0 %v766
    %1119 = vmatpush.msra.mxu0 %v765
    %1120 = vmatpush.msra.mxu0 %v764
    %1121 = vmatpush.msra.mxu0 %v763
    %1122 = vmatmul.f32.gmra.mxu0 %v1104
    %v1123 = vpop.f32.mrf.mxu0
    %v1124 = vadd.f32 0.0, %v1123
    %1125 = vdwg.mxu0
    %v1127 = vrot.slane %v1124, 6
    %v1129 = vadd.f32 %v760, %v1127
    %v1130 = vxor.u32 %v1129, 2147483648
    %v1131 = vmul.f32 %v1130, 1.442695
    %v1132 = vpow.pop %v1131
    %v1133 = vadd.f32 %v1132, 1.0
    %v1134 = vrcp.pop %v1133
    %v1135 = vmul.f32 %v1133, %v1134
    %v1136 = vsub.f32 1.0, %v1135
    %v1137 = vmul.f32 %v1134, %v1136
    %v1138 = vadd.f32 %v1134, %v1137
    %vm1139 = vweird.f32 %v1133
    %vm1140 = vweird.f32 %v1134
    %vm1141 = vmor %vm1139, %vm1140
    %v1142 = vsel %vm1141, %v1134, %v1138
    %v1143 = vand.u32 2147483647, %v1133
    %vm1144 = vcmp.eq.f32.partialorder %v1143, 8.507059e+37
    %v1145 = vand.u32 %v1133, 2147483648
    %v1146 = vor.u32 1.1754944e-38, %v1145
    %v1147 = vsel %vm1144, %v1146, %v1142
    %v1148 = vmul.f32 1.0, %v1147
    %v1149 = vtanh.pop %v1129
    %v1151 = vrot.slane %v1094, 6
    %v1153 = vmul.f32 %v1148, %v1151
    %1155 = vrot.lane.b32.xlu0 %v1149, 64
    %v1156 = vpop.permute.xlu0 %1155
    %v1158 = vmul.f32 %v1148, %v1156
    %1160 = vrot.lane.b32.xlu0 %v1158, 32
    %v1161 = vpop.permute.xlu0 %1160
    %v1163 = vadd.f32 %v1153, %v1161
    %v1164 = vtanh.pop %v1163
    %1166 = vrot.lane.b32.xlu0 %v1164, 64
    %v1167 = vpop.permute.xlu0 %1166
    %v1169 = vmul.f32 %v1148, %v1167
    %v1171 = vrot.slane %v1169, 2
    %1172 = vrot.lane.b32.xlu0 %v1171, 32
    %v1173 = vpop.permute.xlu0 %1172
    %v1174 = vsel %vm93, %v1173, 0
    %1176 = vmatpush.msra.mxu0 0.0
    %1177 = vmatpush.msra.mxu0 0.0
    %1178 = vmatpush.msra.mxu0 0.0
    %1179 = vmatpush.msra.mxu0 0.0
    %1180 = vmatpush.msra.mxu0 0.0
    %1181 = vmatpush.msra.mxu0 0.0
    %1182 = vmatpush.msra.mxu0 0.0
    %1183 = vmatpush.msra.mxu0 0.0
    %1184 = vmatpush.msra.mxu0 0.0
    %1185 = vmatpush.msra.mxu0 0.0
    %1186 = vmatpush.msra.mxu0 0.0
    %1187 = vmatpush.msra.mxu0 0.0
    %1188 = vmatpush.msra.mxu0 %v766
    %1189 = vmatpush.msra.mxu0 %v765
    %1190 = vmatpush.msra.mxu0 %v764
    %1191 = vmatpush.msra.mxu0 %v763
    %1192 = vmatmul.f32.gmra.mxu0 %v1174
    %v1193 = vpop.f32.mrf.mxu0
    %v1194 = vadd.f32 0.0, %v1193
    %1195 = vdwg.mxu0
    %v1197 = vrot.slane %v1194, 4
    %v1199 = vadd.f32 %v760, %v1197
    %v1200 = vxor.u32 %v1199, 2147483648
    %v1201 = vmul.f32 %v1200, 1.442695
    %v1202 = vpow.pop %v1201
    %v1203 = vadd.f32 %v1202, 1.0
    %v1204 = vrcp.pop %v1203
    %v1205 = vmul.f32 %v1203, %v1204
    %v1206 = vsub.f32 1.0, %v1205
    %v1207 = vmul.f32 %v1204, %v1206
    %v1208 = vadd.f32 %v1204, %v1207
    %vm1209 = vweird.f32 %v1203
    %vm1210 = vweird.f32 %v1204
    %vm1211 = vmor %vm1209, %vm1210
    %v1212 = vsel %vm1211, %v1204, %v1208
    %v1213 = vand.u32 2147483647, %v1203
    %vm1214 = vcmp.eq.f32.partialorder %v1213, 8.507059e+37
    %v1215 = vand.u32 %v1203, 2147483648
    %v1216 = vor.u32 1.1754944e-38, %v1215
    %v1217 = vsel %vm1214, %v1216, %v1212
    %v1218 = vmul.f32 1.0, %v1217
    %v1219 = vtanh.pop %v1199
    %v1221 = vrot.slane %v1163, 6
    %v1223 = vmul.f32 %v1218, %v1221
    %1225 = vrot.lane.b32.xlu0 %v1219, 64
    %v1226 = vpop.permute.xlu0 %1225
    %v1228 = vmul.f32 %v1218, %v1226
    %1230 = vrot.lane.b32.xlu0 %v1228, 32
    %v1231 = vpop.permute.xlu0 %1230
    %v1233 = vadd.f32 %v1223, %v1231
    %v1234 = vtanh.pop %v1233
    %1236 = vrot.lane.b32.xlu0 %v1234, 64
    %v1237 = vpop.permute.xlu0 %1236
    %v1239 = vmul.f32 %v1218, %v1237
    %v1241 = vrot.slane %v1239, 4
    %1242 = vrot.lane.b32.xlu0 %v1241, 32
    %v1243 = vpop.permute.xlu0 %1242
    %v1244 = vsel %vm93, %v1243, 0
    %1246 = vmatpush.msra.mxu0 0.0
    %1247 = vmatpush.msra.mxu0 0.0
    %1248 = vmatpush.msra.mxu0 0.0
    %1249 = vmatpush.msra.mxu0 0.0
    %1250 = vmatpush.msra.mxu0 0.0
    %1251 = vmatpush.msra.mxu0 0.0
    %1252 = vmatpush.msra.mxu0 0.0
    %1253 = vmatpush.msra.mxu0 0.0
    %1254 = vmatpush.msra.mxu0 0.0
    %1255 = vmatpush.msra.mxu0 0.0
    %1256 = vmatpush.msra.mxu0 0.0
    %1257 = vmatpush.msra.mxu0 0.0
    %1258 = vmatpush.msra.mxu0 %v766
    %1259 = vmatpush.msra.mxu0 %v765
    %1260 = vmatpush.msra.mxu0 %v764
    %1261 = vmatpush.msra.mxu0 %v763
    %1262 = vmatmul.f32.gmra.mxu0 %v1244
    %v1263 = vpop.f32.mrf.mxu0
    %v1264 = vadd.f32 0.0, %v1263
    %1265 = vdwg.mxu0
    %v1267 = vrot.slane %v1264, 2
    %v1269 = vadd.f32 %v760, %v1267
    %v1270 = vxor.u32 %v1269, 2147483648
    %v1271 = vmul.f32 %v1270, 1.442695
    %v1272 = vpow.pop %v1271
    %v1273 = vadd.f32 %v1272, 1.0
    %v1274 = vrcp.pop %v1273
    %v1275 = vmul.f32 %v1273, %v1274
    %v1276 = vsub.f32 1.0, %v1275
    %v1277 = vmul.f32 %v1274, %v1276
    %v1278 = vadd.f32 %v1274, %v1277
    %vm1279 = vweird.f32 %v1273
    %vm1280 = vweird.f32 %v1274
    %vm1281 = vmor %vm1279, %vm1280
    %v1282 = vsel %vm1281, %v1274, %v1278
    %v1283 = vand.u32 2147483647, %v1273
    %vm1284 = vcmp.eq.f32.partialorder %v1283, 8.507059e+37
    %v1285 = vand.u32 %v1273, 2147483648
    %v1286 = vor.u32 1.1754944e-38, %v1285
    %v1287 = vsel %vm1284, %v1286, %v1282
    %v1288 = vmul.f32 1.0, %v1287
    %v1289 = vtanh.pop %v1269
    %v1291 = vrot.slane %v1233, 6
    %v1293 = vmul.f32 %v1288, %v1291
    %1295 = vrot.lane.b32.xlu0 %v1289, 64
    %v1296 = vpop.permute.xlu0 %1295
    %v1298 = vmul.f32 %v1288, %v1296
    %1300 = vrot.lane.b32.xlu0 %v1298, 32
    %v1301 = vpop.permute.xlu0 %1300
    %v1303 = vadd.f32 %v1293, %v1301
    %v1304 = vtanh.pop %v1303
    %1306 = vrot.lane.b32.xlu0 %v1304, 64
    %v1307 = vpop.permute.xlu0 %1306
    %v1309 = vmul.f32 %v1288, %v1307
    %v1310 = vsel %vm710, %v824, %v893
    %v1311 = vsel %vm712, %v1310, %v963
    %v1312 = vsel %vm714, %v1311, %v1033
    %v1313 = vsel %vm710, %v1100, %v1169
    %v1314 = vsel %vm712, %v1313, %v1239
    %v1315 = vsel %vm714, %v1314, %v1309
    %v1316 = vld [vmem:[#allocation6] sm:$0xff]
    %v1317 = vld [vmem:[#allocation6 + $0x8] sm:$0xff]
    %v1318 = vld [vmem:[#allocation6 + $0x10] sm:$0xff]
    %v1319 = vld [vmem:[#allocation6 + $0x18] sm:$0xff]
    %v1320 = vld [vmem:[%s8] sm:$0x1]
    %v1322 = vperm.slane %v1320, 0
    %1326 = vrot.lane.b32.xlu0 %v1312, 32
    %v1327 = vpop.permute.xlu0 %1326
    %1328 = vrot.lane.b32.xlu0 %v1315, 32
    %v1329 = vpop.permute.xlu0 %1328
    %v1330 = vsel %vm93, %v1327, 0
    %v1332 = vsel %vm93, %v1329, 0
    %1334 = vmatpush.msra.mxu0 0.0
    %1335 = vmatpush.msra.mxu0 0.0
    %1336 = vmatpush.msra.mxu0 0.0
    %1337 = vmatpush.msra.mxu0 0.0
    %1338 = vmatpush.msra.mxu0 0.0
    %1339 = vmatpush.msra.mxu0 0.0
    %1340 = vmatpush.msra.mxu0 0.0
    %1341 = vmatpush.msra.mxu0 0.0
    %1342 = vmatpush.msra.mxu0 0.0
    %1343 = vmatpush.msra.mxu0 0.0
    %1344 = vmatpush.msra.mxu0 0.0
    %1345 = vmatpush.msra.mxu0 0.0
    %1346 = vmatpush.msra.mxu0 %v1319
    %1347 = vmatpush.msra.mxu0 %v1318
    %1348 = vmatpush.msra.mxu0 %v1317
    %1349 = vmatpush.msra.mxu0 %v1316
    %1350 = vmatmul.f32.gmra.mxu0 %v1330
    %v1351 = vpop.f32.mrf.mxu0
    %v1352 = vadd.f32 %v1322, %v1351
    %1353 = vmatmul.f32.gmra.mxu0 %v1332
    %v1354 = vpop.f32.mrf.mxu0
    %v1355 = vadd.f32 %v1322, %v1354
    %1356 = vdwg.mxu0
    %1357 = vst.msk [vmem:[%s9] sm:$0xff] %vm93, %v1352
    %1358 = vst.msk [vmem:[%s9 + $0x8] sm:$0xff] %vm93, %v1355
    // Predicated region
    $region50: #{torso_forward.1} parent=1 // pred_check
      _
    $region51: #{torso_forward.1} parent=1 // pred_check_branch
      %1360 = sbr.rel (0) target = $region53
    $region52: #{torso_forward.1} parent=1 // pred_region
      _
    $region53: #{torso_forward.1} parent=1 // pred_fallthru
      _
    // Predicated region
    $region54: #{torso_forward.1} parent=1 // pred_check
      _
    $region55: #{torso_forward.1} parent=1 // pred_check_branch
      %1362 = sbr.rel (0) target = $region57
    $region56: #{torso_forward.1} parent=1 // pred_region
      _
    $region57: #{torso_forward.1} parent=1 // pred_fallthru
      _
    %1363 = vsyncpa [#allocation3], 1
    %1364 = vsyncpa [#allocation5], 1

</llo_original>
